<compile_context>
chip_gen: v7x
topology: tpu7x:2x2x1
jax: 0.10.0
libtpu: 0.0.40
codegen_flags: <defaults>
</compile_context>

<pallas_src>
import functools
import math

import jax
import jax.numpy as jnp
from jax.experimental import pallas as pl
from jax.experimental.pallas import tpu as pltpu

LN_EPS = 1e-12  # BERT LayerNorm eps


# ----------------------------- in-kernel helpers -----------------------------

def _layer_norm(x, gamma, beta):
    # x: (rows, H); gamma/beta: (1, H)
    mu = jnp.mean(x, axis=-1, keepdims=True)
    xc = x - mu
    var = jnp.mean(xc * xc, axis=-1, keepdims=True)
    inv = jax.lax.rsqrt(var + LN_EPS)
    return xc * inv * gamma + beta


def _gelu(x):
    # TODO(synk): HF BERT default "gelu" is erf-based; this is the tanh approximation
    # (gelu_new). The in-file reference matches it.
    return 0.5 * x * (1.0 + jnp.tanh(0.7978845608028654 * (x + 0.044715 * x * x * x)))


# --------------------------------- kernels -----------------------------------

def embeddings_kernel(feat_ref, pos_ref, tok_ref, g_ref, b_ref, o_ref):
    # BertEmbeddings: inputs_embeds + position_emb + token_type_emb -> LayerNorm
    x = feat_ref[0] + pos_ref[0] + tok_ref[0]        # (S, H)
    o_ref[0] = _layer_norm(x, g_ref[...], b_ref[...])


def attention_kernel(num_heads,
                     x_ref, mask_ref, wqkv_ref, bqkv_ref, wo_ref, bo_ref,
                     g_ref, b_ref, o_ref, acc_ref):
    # BertSelfAttention + BertSelfOutput for one (batch element, head).
    # Grid: (B, num_heads); the head axis is a reduction into acc_ref (S, H) f32.
    h = pl.program_id(1)

    x = x_ref[0]                                     # (S, H) f32 residual path
    xb = x.astype(jnp.bfloat16)
    hd = wo_ref.shape[1]

    @pl.when(h == 0)
    def _():
        acc_ref[...] = jnp.zeros_like(acc_ref)

    # Per-head fused QKV projection: (S, 3*hd). 1/sqrt(hd) is pre-folded into the
    # Q columns of wqkv/bqkv.
    qkv = jnp.dot(xb, wqkv_ref[0],
                  preferred_element_type=jnp.float32) + bqkv_ref[0]
    q = qkv[:, :hd].astype(jnp.bfloat16)
    k = qkv[:, hd:2 * hd].astype(jnp.bfloat16)
    v = qkv[:, 2 * hd:].astype(jnp.bfloat16)

    # q @ k^T without an explicit transpose (contract on the head dim).
    s = jax.lax.dot_general(q, k, (((1,), (1,)), ((), ())),
                            preferred_element_type=jnp.float32)        # (S, S)
    s = s + mask_ref[0]                              # (1, S) additive mask, broadcast
    s = s - jnp.max(s, axis=-1, keepdims=True)
    p = jnp.exp(s)                                   # unnormalized probabilities
    l = jnp.sum(p, axis=-1, keepdims=True)           # (S, 1)

    ctx_h = jnp.dot(p.astype(jnp.bfloat16), v,
                    preferred_element_type=jnp.float32)                # (S, hd)
    ctx_h = ctx_h * pl.reciprocal(l, approx=True)    # normalize after PV: (S,hd) mul

    # Partial output projection with this head's aligned (hd, H) Wo block.
    # TODO(synk): K=hd underuses MXU depth; a single K=H ctx@Wo needs a lane-offset
    # dynamic scatter into an (S,H) ctx scratch — revisit once verified on target jax.
    acc_ref[...] += jnp.dot(ctx_h.astype(jnp.bfloat16), wo_ref[0],
                            preferred_element_type=jnp.float32)

    @pl.when(h == num_heads - 1)
    def _():
        attn = acc_ref[...] + bo_ref[...]
        o_ref[0] = _layer_norm(attn + x, g_ref[...], b_ref[...])


def ffn_kernel(n_i, x_ref, w1_ref, b1_ref, w2_ref, b2_ref, g_ref, b_ref,
               o_ref, acc_ref):
    # BertIntermediate (GELU) + BertOutput (residual + LayerNorm) on a flattened
    # (rows, H) tile. Grid: (row_tiles, I_tiles); I axis is a reduction (may be 1).
    x = x_ref[...]                                   # (tR, H) f32
    xb = x.astype(jnp.bfloat16)
    mid = jnp.dot(xb, w1_ref[...], preferred_element_type=jnp.float32) + b1_ref[...]
    mid = _gelu(mid)
    part = jnp.dot(mid.astype(jnp.bfloat16), w2_ref[...],
                   preferred_element_type=jnp.float32)

    if n_i == 1:
        # Whole intermediate dim in one shot: skip the accumulator round-trip.
        o_ref[...] = _layer_norm(part + b2_ref[...] + x, g_ref[...], b_ref[...])
    else:
        it = pl.program_id(1)

        @pl.when(it == 0)
        def _():
            acc_ref[...] = jnp.zeros_like(acc_ref)

        acc_ref[...] += part

        @pl.when(it == n_i - 1)
        def _():
            y = acc_ref[...] + b2_ref[...] + x
            o_ref[...] = _layer_norm(y, g_ref[...], b_ref[...])


# ------------------------------ pallas wrappers -------------------------------

@functools.lru_cache(maxsize=None)
def _vmem_limit_bytes():
    # Generation-aware scoped-VMEM limit: use most of v5e/v6e's 128 MiB, stay
    # conservative on v7x's 64 MiB. Falls back to 64 MiB if the query is unavailable.
    try:
        cap = pltpu.get_tpu_info().vmem_capacity_bytes
    except Exception:
        cap = 64 * 1024 * 1024
    return int(min(max(cap - 16 * 1024 * 1024, 32 * 1024 * 1024), 100 * 1024 * 1024))


def _cparams(dim_sem):
    return pltpu.CompilerParams(dimension_semantics=dim_sem,
                                vmem_limit_bytes=_vmem_limit_bytes())


def embeddings_ln(feat, pos_emb, tok_emb, gamma, beta):
    B, S, H = feat.shape
    per_b = pl.BlockSpec((1, S, H), lambda b: (b, 0, 0))
    vec = pl.BlockSpec((1, H), lambda b: (0, 0))
    return pl.pallas_call(
        embeddings_kernel,
        out_shape=jax.ShapeDtypeStruct((B, S, H), jnp.float32),
        grid=(B,),
        in_specs=[per_b, per_b, per_b, vec, vec],
        out_specs=per_b,
        compiler_params=_cparams(("parallel",)),
    )(feat, pos_emb, tok_emb, gamma, beta)


def attention_block(x, mask_add, p, num_heads):
    B, S, H = x.shape
    hd = H // num_heads
    per_b = pl.BlockSpec((1, S, H), lambda b, h: (b, 0, 0))
    vec_h = pl.BlockSpec((1, H), lambda b, h: (0, 0))
    return pl.pallas_call(
        functools.partial(attention_kernel, num_heads),
        out_shape=jax.ShapeDtypeStruct((B, S, H), jnp.float32),
        grid=(B, num_heads),
        in_specs=[per_b,
                  pl.BlockSpec((1, 1, S), lambda b, h: (b, 0, 0)),        # additive mask
                  pl.BlockSpec((1, H, 3 * hd), lambda b, h: (h, 0, 0)),   # per-head QKV (bf16)
                  pl.BlockSpec((1, 1, 3 * hd), lambda b, h: (h, 0, 0)),   # per-head QKV bias
                  pl.BlockSpec((1, hd, H), lambda b, h: (h, 0, 0)),       # per-head Wo (bf16)
                  vec_h, vec_h, vec_h],
        out_specs=per_b,
        scratch_shapes=[pltpu.VMEM((S, H), jnp.float32)],                 # attn accumulator
        compiler_params=_cparams(("parallel", "arbitrary")),
    )(x, mask_add, p["wqkv_h"], p["bqkv_h"], p["wo_h"], p["bo"],
      p["attn_ln_g"], p["attn_ln_b"])


def _pick_itile(H, I):
    # Prefer no intermediate tiling when both bf16 weight slabs fit comfortably in
    # VMEM (BERT-base/large scale); otherwise tile at a 256-multiple.
    if 2 * H * I * 2 <= 24 * 1024 * 1024:
        return I
    for t in (1024, 512, 256):
        if I >= t and I % t == 0:
            return t
    return I


def _pick_rtile(R):
    # Row tile of the flattened (B*S) axis: as large as is spill-safe so W1/W2 HBM
    # re-fetches are amortized across many rows.
    for t in (512, 256, 128):
        if R >= t and R % t == 0:
            return t
    return R


def ffn_block(x, p):
    B, S, H = x.shape
    R = B * S
    I = p["w1"].shape[1]
    tI = _pick_itile(H, I)
    tR = _pick_rtile(R)
    n_i = I // tI
    x2 = x.reshape(R, H)
    rows = pl.BlockSpec((tR, H), lambda r, i: (r, 0))
    vec_h = pl.BlockSpec((1, H), lambda r, i: (0, 0))
    out = pl.pallas_call(
        functools.partial(ffn_kernel, n_i),
        out_shape=jax.ShapeDtypeStruct((R, H), jnp.float32),
        grid=(R // tR, n_i),
        in_specs=[rows,
                  pl.BlockSpec((H, tI), lambda r, i: (0, i)),   # W1 tile (bf16)
                  pl.BlockSpec((1, tI), lambda r, i: (0, i)),   # b1 tile
                  pl.BlockSpec((tI, H), lambda r, i: (i, 0)),   # W2 tile (bf16)
                  vec_h, vec_h, vec_h],
        out_specs=rows,
        scratch_shapes=[pltpu.VMEM((tR, H), jnp.float32)],      # unused when n_i == 1
        compiler_params=_cparams(("parallel", "arbitrary")),
    )(x2, p["w1"], p["b1"], p["w2"], p["b2"], p["ffn_ln_g"], p["ffn_ln_b"])
    return out.reshape(B, S, H)


# ------------------------------- full forward ---------------------------------

def prepare_kernel_params(params, num_heads):
    """One-time weight prep: fold softmax scale into Q, split per head, cast matmul
    weights to bf16 (biases / LN params stay f32). Call once, outside the forward."""
    kp = {
        "pos_table": params["pos_table"],
        "tok_table": params["tok_table"],
        "emb_ln_g": params["emb_ln_g"],
        "emb_ln_b": params["emb_ln_b"],
        "layers": [],
    }
    for p in params["layers"]:
        H = p["wq"].shape[0]
        hd = H // num_heads
        scale = 1.0 / math.sqrt(hd)
        wq = (p["wq"] * scale).reshape(H, num_heads, hd)       # scale folded into Q
        wk = p["wk"].reshape(H, num_heads, hd)
        wv = p["wv"].reshape(H, num_heads, hd)
        wqkv_h = jnp.transpose(jnp.concatenate([wq, wk, wv], axis=-1),
                               (1, 0, 2)).astype(jnp.bfloat16)  # (nh, H, 3*hd)
        bq = (p["bq"] * scale).reshape(num_heads, 1, hd)
        bk = p["bk"].reshape(num_heads, 1, hd)
        bv = p["bv"].reshape(num_heads, 1, hd)
        bqkv_h = jnp.concatenate([bq, bk, bv], axis=-1)         # (nh, 1, 3*hd) f32
        kp["layers"].append({
            "wqkv_h": wqkv_h,
            "bqkv_h": bqkv_h,
            "wo_h": p["wo"].reshape(num_heads, hd, H).astype(jnp.bfloat16),
            "bo": p["bo"],
            "attn_ln_g": p["attn_ln_g"], "attn_ln_b": p["attn_ln_b"],
            "w1": p["w1"].astype(jnp.bfloat16), "b1": p["b1"],
            "w2": p["w2"].astype(jnp.bfloat16), "b2": p["b2"],
            "ffn_ln_g": p["ffn_ln_g"], "ffn_ln_b": p["ffn_ln_b"],
        })
    return kp


def transformer_base_model(features, position_ids, token_type_ids, attention_mask,
                           kernel_params, num_heads):
    kp = kernel_params
    # Embedding-table gathers are glue (plain JAX, data-dependent ids); the add +
    # LayerNorm runs in-kernel.
    # TODO(synk): gather pos/token rows in-kernel via scalar prefetch to avoid the
    # (B,S,H) pos/token HBM materialization.
    pos_emb = jnp.take(kp["pos_table"], position_ids, axis=0)     # (B, S, H)
    tok_emb = jnp.take(kp["tok_table"], token_type_ids, axis=0)   # (B, S, H)
    x = embeddings_ln(features, pos_emb, tok_emb, kp["emb_ln_g"], kp["emb_ln_b"])
    # HF-style extended additive attention mask, kept at (B, 1, S): broadcast along
    # the query axis inside the kernel (no O(B*S^2) HBM traffic).
    mask_add = ((1.0 - attention_mask.astype(jnp.float32)) * -10000.0)[:, None, :]
    for lyr in kp["layers"]:
        x = attention_block(x, mask_add, lyr, num_heads)
        x = ffn_block(x, lyr)
    return x  # sequence_output


# ---------------------------- pure-JAX reference -------------------------------

def reference_model(features, position_ids, token_type_ids, attention_mask,
                    params, num_heads):
    def ln(x, g, b):
        mu = jnp.mean(x, axis=-1, keepdims=True)
        var = jnp.mean((x - mu) ** 2, axis=-1, keepdims=True)
        return (x - mu) * jax.lax.rsqrt(var + LN_EPS) * g + b

    B, S, H = features.shape
    hd = H // num_heads
    x = features + jnp.take(params["pos_table"], position_ids, axis=0) \
        + jnp.take(params["tok_table"], token_type_ids, axis=0)
    x = ln(x, params["emb_ln_g"], params["emb_ln_b"])
    mask_add = ((1.0 - attention_mask.astype(jnp.float32)) * -10000.0)[:, None, None, :]
    for p in params["layers"]:
        q = (x @ p["wq"] + p["bq"]).reshape(B, S, num_heads, hd).transpose(0, 2, 1, 3)
        k = (x @ p["wk"] + p["bk"]).reshape(B, S, num_heads, hd).transpose(0, 2, 1, 3)
        v = (x @ p["wv"] + p["bv"]).reshape(B, S, num_heads, hd).transpose(0, 2, 1, 3)
        s = jnp.einsum("bhqd,bhkd->bhqk", q, k) / math.sqrt(hd) + mask_add
        a = jax.nn.softmax(s, axis=-1)
        ctx = jnp.einsum("bhqk,bhkd->bhqd", a, v).transpose(0, 2, 1, 3).reshape(B, S, H)
        x = ln(ctx @ p["wo"] + p["bo"] + x, p["attn_ln_g"], p["attn_ln_b"])
        h = _gelu(x @ p["w1"] + p["b1"])
        x = ln(h @ p["w2"] + p["b2"] + x, p["ffn_ln_g"], p["ffn_ln_b"])
    return x


# ----------------------------------- main --------------------------------------

def init_params(key, num_layers, H, I, max_pos, type_vocab):
    keys = jax.random.split(key, 3 + num_layers)
    std = 0.02
    params = {
        "pos_table": jax.random.normal(keys[0], (max_pos, H), jnp.float32) * std,
        "tok_table": jax.random.normal(keys[1], (type_vocab, H), jnp.float32) * std,
        "emb_ln_g": jnp.ones((1, H), jnp.float32),
        "emb_ln_b": jnp.zeros((1, H), jnp.float32),
        "layers": [],
    }
    for li in range(num_layers):
        lk = jax.random.split(keys[3 + li], 6)
        params["layers"].append({
            "wq": jax.random.normal(lk[0], (H, H), jnp.float32) * std,
            "bq": jnp.zeros((1, H), jnp.float32),
            "wk": jax.random.normal(lk[1], (H, H), jnp.float32) * std,
            "bk": jnp.zeros((1, H), jnp.float32),
            "wv": jax.random.normal(lk[2], (H, H), jnp.float32) * std,
            "bv": jnp.zeros((1, H), jnp.float32),
            "wo": jax.random.normal(lk[3], (H, H), jnp.float32) * std,
            "bo": jnp.zeros((1, H), jnp.float32),
            "attn_ln_g": jnp.ones((1, H), jnp.float32),
            "attn_ln_b": jnp.zeros((1, H), jnp.float32),
            "w1": jax.random.normal(lk[4], (H, I), jnp.float32) * std,
            "b1": jnp.zeros((1, I), jnp.float32),
            "w2": jax.random.normal(lk[5], (I, H), jnp.float32) * std,
            "b2": jnp.zeros((1, H), jnp.float32),
            "ffn_ln_g": jnp.ones((1, H), jnp.float32),
            "ffn_ln_b": jnp.zeros((1, H), jnp.float32),
        })
    return params


if __name__ == "__main__":
    B, S, H = 2, 8, 32
    NUM_HEADS, INTERMEDIATE, NUM_LAYERS = 4, 64, 2
    MAX_POS, TYPE_VOCAB = 16, 2

    key = jax.random.PRNGKey(0)
    k_feat, k_params = jax.random.split(key)

    features = jax.random.normal(k_feat, (B, S, H), jnp.float32)
    position_ids = jnp.broadcast_to(jnp.arange(S, dtype=jnp.int32), (B, S))
    token_type_ids = jnp.zeros((B, S), jnp.int32)
    attention_mask = jnp.ones((B, S), jnp.float32)

    params = init_params(k_params, NUM_LAYERS, H, INTERMEDIATE, MAX_POS, TYPE_VOCAB)

    # Weight prep is hoisted out of the forward; the forward itself is jitted.
    kernel_params = jax.block_until_ready(prepare_kernel_params(params, NUM_HEADS))
    fwd = jax.jit(functools.partial(transformer_base_model, num_heads=NUM_HEADS))

    out = fwd(features, position_ids, token_type_ids, attention_mask, kernel_params)
    out = jax.block_until_ready(out)

    ref = reference_model(features, position_ids, token_type_ids,
                          attention_mask, params, NUM_HEADS)
    assert out.shape == (B, S, H)
    # bf16 matmul operands (f32 accumulation) -> looser tolerance vs. pure-f32 reference.
    assert jnp.allclose(out, ref, atol=2e-2, rtol=2e-2)

    print("KERNEL_OK")
</pallas_src>

<mosaic_0001>
module attributes {stable_mosaic.version = 11 : i64} {
  func.func @embeddings_kernel(%arg0: i32, %arg1: memref<1x8x32xf32, #tpu.memory_space<vmem>>, %arg2: memref<1x8x32xf32, #tpu.memory_space<vmem>>, %arg3: memref<1x8x32xf32, #tpu.memory_space<vmem>>, %arg4: memref<1x32xf32, #tpu.memory_space<vmem>>, %arg5: memref<1x32xf32, #tpu.memory_space<vmem>>, %arg6: memref<1x8x32xf32, #tpu.memory_space<vmem>>) attributes {dimension_semantics = [#tpu.dimension_semantics<parallel>], iteration_bounds = array<i64: 2>, scalar_prefetch = 0 : i64, scratch_operands = 0 : i64, tpu.core_type = #tpu.core_type<tc>, window_params = [{transform_indices = @transform_0, window_bounds = array<i64: 1, 8, 32>}, {transform_indices = @transform_1, window_bounds = array<i64: 1, 8, 32>}, {transform_indices = @transform_2, window_bounds = array<i64: 1, 8, 32>}, {pipeline_mode = #tpu.pipeline_mode<synchronous>, transform_indices = @transform_3, window_bounds = array<i64: 1, 32>}, {pipeline_mode = #tpu.pipeline_mode<synchronous>, transform_indices = @transform_4, window_bounds = array<i64: 1, 32>}, {transform_indices = @transform_5, window_bounds = array<i64: 1, 8, 32>}]} {
    %c0 = arith.constant 0 : index
    %c0_0 = arith.constant 0 : index
    %c0_1 = arith.constant 0 : index
    %0 = vector.load %arg1[%c0, %c0_0, %c0_1] : memref<1x8x32xf32, #tpu.memory_space<vmem>>, vector<1x8x32xf32>
    %1 = vector.shape_cast %0 : vector<1x8x32xf32> to vector<8x32xf32>
    %c0_2 = arith.constant 0 : index
    %c0_3 = arith.constant 0 : index
    %c0_4 = arith.constant 0 : index
    %2 = vector.load %arg2[%c0_2, %c0_3, %c0_4] : memref<1x8x32xf32, #tpu.memory_space<vmem>>, vector<1x8x32xf32>
    %3 = vector.shape_cast %2 : vector<1x8x32xf32> to vector<8x32xf32>
    %4 = arith.addf %1, %3 : vector<8x32xf32>
    %c0_5 = arith.constant 0 : index
    %c0_6 = arith.constant 0 : index
    %c0_7 = arith.constant 0 : index
    %5 = vector.load %arg3[%c0_5, %c0_6, %c0_7] : memref<1x8x32xf32, #tpu.memory_space<vmem>>, vector<1x8x32xf32>
    %6 = vector.shape_cast %5 : vector<1x8x32xf32> to vector<8x32xf32>
    %7 = arith.addf %4, %6 : vector<8x32xf32>
    %c0_8 = arith.constant 0 : index
    %c0_9 = arith.constant 0 : index
    %8 = vector.load %arg4[%c0_8, %c0_9] : memref<1x32xf32, #tpu.memory_space<vmem>>, vector<1x32xf32>
    %c0_10 = arith.constant 0 : index
    %c0_11 = arith.constant 0 : index
    %9 = vector.load %arg5[%c0_10, %c0_11] : memref<1x32xf32, #tpu.memory_space<vmem>>, vector<1x32xf32>
    %cst = arith.constant dense<0.000000e+00> : vector<8xf32>
    %10 = vector.multi_reduction <add>, %7, %cst [1] : vector<8x32xf32> to vector<8xf32>
    %11 = vector.shape_cast %10 : vector<8xf32> to vector<8x1xf32>
    %cst_12 = arith.constant 3.200000e+01 : f32
    %12 = vector.broadcast %cst_12 : f32 to vector<8x1xf32>
    %13 = arith.divf %11, %12 : vector<8x1xf32>
    %14 = vector.broadcast %13 : vector<8x1xf32> to vector<8x32xf32>
    %15 = arith.subf %7, %14 : vector<8x32xf32>
    %16 = arith.mulf %15, %15 : vector<8x32xf32>
    %cst_13 = arith.constant dense<0.000000e+00> : vector<8xf32>
    %17 = vector.multi_reduction <add>, %16, %cst_13 [1] : vector<8x32xf32> to vector<8xf32>
    %18 = vector.shape_cast %17 : vector<8xf32> to vector<8x1xf32>
    %cst_14 = arith.constant 3.200000e+01 : f32
    %19 = vector.broadcast %cst_14 : f32 to vector<8x1xf32>
    %20 = arith.divf %18, %19 : vector<8x1xf32>
    %cst_15 = arith.constant 9.99999996E-13 : f32
    %21 = vector.broadcast %cst_15 : f32 to vector<8x1xf32>
    %22 = arith.addf %20, %21 : vector<8x1xf32>
    %23 = math.rsqrt %22 : vector<8x1xf32>
    %24 = vector.broadcast %23 : vector<8x1xf32> to vector<8x32xf32>
    %25 = arith.mulf %15, %24 : vector<8x32xf32>
    %26 = vector.broadcast %8 : vector<1x32xf32> to vector<8x32xf32>
    %27 = arith.mulf %25, %26 : vector<8x32xf32>
    %28 = vector.broadcast %9 : vector<1x32xf32> to vector<8x32xf32>
    %29 = arith.addf %27, %28 : vector<8x32xf32>
    %c0_16 = arith.constant 0 : index
    %c0_17 = arith.constant 0 : index
    %c0_18 = arith.constant 0 : index
    %30 = vector.load %arg6[%c0_16, %c0_17, %c0_18] : memref<1x8x32xf32, #tpu.memory_space<vmem>>, vector<1x8x32xf32>
    %31 = vector.shape_cast %30 : vector<1x8x32xf32> to vector<8x32xf32>
    %32 = vector.shape_cast %29 : vector<8x32xf32> to vector<1x8x32xf32>
    tpu.vector_store %arg6[%c0_16, %c0_17, %c0_18], %32 {strides = array<i32>} : memref<1x8x32xf32, #tpu.memory_space<vmem>>, vector<1x8x32xf32>,
    return
  }
  func.func @transform_0(%arg0: i32) -> (i32, i32, i32) {
    %c0_i32 = arith.constant 0 : i32
    %c0_i32_0 = arith.constant 0 : i32
    %c0_i32_1 = arith.constant 0 : i32
    return %arg0, %c0_i32, %c0_i32_0 : i32, i32, i32
  }
  func.func @transform_1(%arg0: i32) -> (i32, i32, i32) {
    %c0_i32 = arith.constant 0 : i32
    %c0_i32_0 = arith.constant 0 : i32
    %c0_i32_1 = arith.constant 0 : i32
    return %arg0, %c0_i32, %c0_i32_0 : i32, i32, i32
  }
  func.func @transform_2(%arg0: i32) -> (i32, i32, i32) {
    %c0_i32 = arith.constant 0 : i32
    %c0_i32_0 = arith.constant 0 : i32
    %c0_i32_1 = arith.constant 0 : i32
    return %arg0, %c0_i32, %c0_i32_0 : i32, i32, i32
  }
  func.func @transform_3(%arg0: i32) -> (i32, i32) {
    %c0_i32 = arith.constant 0 : i32
    %c0_i32_0 = arith.constant 0 : i32
    %c0_i32_1 = arith.constant 0 : i32
    return %c0_i32, %c0_i32_0 : i32, i32
  }
  func.func @transform_4(%arg0: i32) -> (i32, i32) {
    %c0_i32 = arith.constant 0 : i32
    %c0_i32_0 = arith.constant 0 : i32
    %c0_i32_1 = arith.constant 0 : i32
    return %c0_i32, %c0_i32_0 : i32, i32
  }
  func.func @transform_5(%arg0: i32) -> (i32, i32, i32) {
    %c0_i32 = arith.constant 0 : i32
    %c0_i32_0 = arith.constant 0 : i32
    %c0_i32_1 = arith.constant 0 : i32
    return %arg0, %c0_i32, %c0_i32_0 : i32, i32, i32
  }
}

module attributes {stable_mosaic.version = 11 : i64} {
  func.func @attention_kernel(%arg0: i32, %arg1: i32, %arg2: memref<1x8x32xf32, #tpu.memory_space<vmem>>, %arg3: memref<1x1x8xf32, #tpu.memory_space<vmem>>, %arg4: memref<1x32x24xbf16, #tpu.memory_space<vmem>>, %arg5: memref<1x1x24xf32, #tpu.memory_space<vmem>>, %arg6: memref<1x8x32xbf16, #tpu.memory_space<vmem>>, %arg7: memref<1x32xf32, #tpu.memory_space<vmem>>, %arg8: memref<1x32xf32, #tpu.memory_space<vmem>>, %arg9: memref<1x32xf32, #tpu.memory_space<vmem>>, %arg10: memref<1x8x32xf32, #tpu.memory_space<vmem>>, %arg11: memref<8x32xf32, #tpu.memory_space<vmem>>) attributes {dimension_semantics = [#tpu.dimension_semantics<parallel>, #tpu.dimension_semantics<arbitrary>], iteration_bounds = array<i64: 2, 4>, scalar_prefetch = 0 : i64, scratch_operands = 1 : i64, tpu.core_type = #tpu.core_type<tc>, window_params = [{transform_indices = @transform_0, window_bounds = array<i64: 1, 8, 32>}, {transform_indices = @transform_1, window_bounds = array<i64: 1, 1, 8>}, {transform_indices = @transform_2, window_bounds = array<i64: 1, 32, 24>}, {transform_indices = @transform_3, window_bounds = array<i64: 1, 1, 24>}, {transform_indices = @transform_4, window_bounds = array<i64: 1, 8, 32>}, {pipeline_mode = #tpu.pipeline_mode<synchronous>, transform_indices = @transform_5, window_bounds = array<i64: 1, 32>}, {pipeline_mode = #tpu.pipeline_mode<synchronous>, transform_indices = @transform_6, window_bounds = array<i64: 1, 32>}, {pipeline_mode = #tpu.pipeline_mode<synchronous>, transform_indices = @transform_7, window_bounds = array<i64: 1, 32>}, {transform_indices = @transform_8, window_bounds = array<i64: 1, 8, 32>}]} {
    %c0 = arith.constant 0 : index
    %c0_0 = arith.constant 0 : index
    %c0_1 = arith.constant 0 : index
    %0 = vector.load %arg2[%c0, %c0_0, %c0_1] : memref<1x8x32xf32, #tpu.memory_space<vmem>>, vector<1x8x32xf32>
    %1 = vector.shape_cast %0 : vector<1x8x32xf32> to vector<8x32xf32>
    %2 = arith.truncf %1 : vector<8x32xf32> to vector<8x32xbf16>
    %c0_i32 = arith.constant 0 : i32
    %3 = arith.cmpi eq, %arg1, %c0_i32 : i32
    %4 = arith.extui %3 : i1 to i32
    %c0_i32_2 = arith.constant 0 : i32
    %5 = arith.cmpi ne, %4, %c0_i32_2 : i32
    scf.if %5 {
      %cst_25 = arith.constant 0.000000e+00 : f32
      %46 = vector.broadcast %cst_25 : f32 to vector<8x32xf32>
      %c0_26 = arith.constant 0 : index
      %c0_27 = arith.constant 0 : index
      %47 = vector.load %arg11[%c0_26, %c0_27] : memref<8x32xf32, #tpu.memory_space<vmem>>, vector<8x32xf32>
      tpu.vector_store %arg11[%c0_26, %c0_27], %46 {strides = array<i32>} : memref<8x32xf32, #tpu.memory_space<vmem>>, vector<8x32xf32>,
    } else {
    }
    %c0_3 = arith.constant 0 : index
    %c0_4 = arith.constant 0 : index
    %c0_5 = arith.constant 0 : index
    %6 = vector.load %arg4[%c0_3, %c0_4, %c0_5] : memref<1x32x24xbf16, #tpu.memory_space<vmem>>, vector<1x32x24xbf16>
    %7 = vector.shape_cast %6 : vector<1x32x24xbf16> to vector<32x24xbf16>
    %cst = arith.constant dense<0.000000e+00> : vector<8x24xf32>
    %8 = tpu.matmul %2, %7, %cst {dimension_numbers = #tpu.dot_dimension_numbers<[1], [0], [0], [1], [0, 0, 1, 1], [], []>} : vector<8x32xbf16>, vector<32x24xbf16>, vector<8x24xf32> -> vector<8x24xf32>
    %c0_6 = arith.constant 0 : index
    %c0_7 = arith.constant 0 : index
    %c0_8 = arith.constant 0 : index
    %9 = vector.load %arg5[%c0_6, %c0_7, %c0_8] : memref<1x1x24xf32, #tpu.memory_space<vmem>>, vector<1x1x24xf32>
    %10 = vector.shape_cast %9 : vector<1x1x24xf32> to vector<1x24xf32>
    %11 = vector.broadcast %10 : vector<1x24xf32> to vector<8x24xf32>
    %12 = arith.addf %8, %11 : vector<8x24xf32>
    %13 = vector.extract_strided_slice %12 {offsets = [0, 0], sizes = [8, 8], strides = [1, 1]} : vector<8x24xf32> to vector<8x8xf32>
    %14 = arith.truncf %13 : vector<8x8xf32> to vector<8x8xbf16>
    %15 = vector.extract_strided_slice %12 {offsets = [0, 8], sizes = [8, 8], strides = [1, 1]} : vector<8x24xf32> to vector<8x8xf32>
    %16 = arith.truncf %15 : vector<8x8xf32> to vector<8x8xbf16>
    %17 = vector.extract_strided_slice %12 {offsets = [0, 16], sizes = [8, 8], strides = [1, 1]} : vector<8x24xf32> to vector<8x8xf32>
    %18 = arith.truncf %17 : vector<8x8xf32> to vector<8x8xbf16>
    %cst_9 = arith.constant dense<0.000000e+00> : vector<8x8xf32>
    %19 = tpu.matmul %14, %16, %cst_9 {dimension_numbers = #tpu.dot_dimension_numbers<[1], [1], [0], [0], [0, 0, 1, 0], [], []>} : vector<8x8xbf16>, vector<8x8xbf16>, vector<8x8xf32> -> vector<8x8xf32>
    %c0_10 = arith.constant 0 : index
    %c0_11 = arith.constant 0 : index
    %c0_12 = arith.constant 0 : index
    %20 = vector.load %arg3[%c0_10, %c0_11, %c0_12] : memref<1x1x8xf32, #tpu.memory_space<vmem>>, vector<1x1x8xf32>
    %21 = vector.shape_cast %20 : vector<1x1x8xf32> to vector<1x8xf32>
    %22 = vector.broadcast %21 : vector<1x8xf32> to vector<8x8xf32>
    %23 = arith.addf %19, %22 : vector<8x8xf32>
    %cst_13 = arith.constant dense<0xFF800000> : vector<8xf32>
    %24 = vector.multi_reduction <maximumf>, %23, %cst_13 [1] : vector<8x8xf32> to vector<8xf32>
    %25 = vector.shape_cast %24 : vector<8xf32> to vector<8x1xf32>
    %26 = vector.broadcast %25 : vector<8x1xf32> to vector<8x8xf32>
    %27 = arith.subf %23, %26 : vector<8x8xf32>
    %28 = math.exp %27 : vector<8x8xf32>
    %cst_14 = arith.constant dense<0.000000e+00> : vector<8xf32>
    %29 = vector.multi_reduction <add>, %28, %cst_14 [1] : vector<8x8xf32> to vector<8xf32>
    %30 = vector.shape_cast %29 : vector<8xf32> to vector<8x1xf32>
    %31 = arith.truncf %28 : vector<8x8xf32> to vector<8x8xbf16>
    %cst_15 = arith.constant dense<0.000000e+00> : vector<8x8xf32>
    %32 = tpu.matmul %31, %18, %cst_15 {dimension_numbers = #tpu.dot_dimension_numbers<[1], [0], [0], [1], [0, 0, 1, 1], [], []>} : vector<8x8xbf16>, vector<8x8xbf16>, vector<8x8xf32> -> vector<8x8xf32>
    %33 = tpu.reciprocal %30 {approx = true} : vector<8x1xf32> -> vector<8x1xf32>
    %34 = vector.broadcast %33 : vector<8x1xf32> to vector<8x8xf32>
    %35 = arith.mulf %32, %34 : vector<8x8xf32>
    %c0_16 = arith.constant 0 : index
    %c0_17 = arith.constant 0 : index
    %36 = vector.load %arg11[%c0_16, %c0_17] : memref<8x32xf32, #tpu.memory_space<vmem>>, vector<8x32xf32>
    %37 = arith.truncf %35 : vector<8x8xf32> to vector<8x8xbf16>
    %c0_18 = arith.constant 0 : index
    %c0_19 = arith.constant 0 : index
    %c0_20 = arith.constant 0 : index
    %38 = vector.load %arg6[%c0_18, %c0_19, %c0_20] : memref<1x8x32xbf16, #tpu.memory_space<vmem>>, vector<1x8x32xbf16>
    %39 = vector.shape_cast %38 : vector<1x8x32xbf16> to vector<8x32xbf16>
    %cst_21 = arith.constant dense<0.000000e+00> : vector<8x32xf32>
    %40 = tpu.matmul %37, %39, %cst_21 {dimension_numbers = #tpu.dot_dimension_numbers<[1], [0], [0], [1], [0, 0, 1, 1], [], []>} : vector<8x8xbf16>, vector<8x32xbf16>, vector<8x32xf32> -> vector<8x32xf32>
    %41 = arith.addf %36, %40 : vector<8x32xf32>
    %c0_22 = arith.constant 0 : index
    %c0_23 = arith.constant 0 : index
    %42 = vector.load %arg11[%c0_22, %c0_23] : memref<8x32xf32, #tpu.memory_space<vmem>>, vector<8x32xf32>
    tpu.vector_store %arg11[%c0_22, %c0_23], %41 {strides = array<i32>} : memref<8x32xf32, #tpu.memory_space<vmem>>, vector<8x32xf32>,
    %c3_i32 = arith.constant 3 : i32
    %43 = arith.cmpi eq, %arg1, %c3_i32 : i32
    %44 = arith.extui %43 : i1 to i32
    %c0_i32_24 = arith.constant 0 : i32
    %45 = arith.cmpi ne, %44, %c0_i32_24 : i32
    scf.if %45 {
      %c0_25 = arith.constant 0 : index
      %c0_26 = arith.constant 0 : index
      %46 = vector.load %arg11[%c0_25, %c0_26] : memref<8x32xf32, #tpu.memory_space<vmem>>, vector<8x32xf32>
      %c0_27 = arith.constant 0 : index
      %c0_28 = arith.constant 0 : index
      %47 = vector.load %arg7[%c0_27, %c0_28] : memref<1x32xf32, #tpu.memory_space<vmem>>, vector<1x32xf32>
      %48 = vector.broadcast %47 : vector<1x32xf32> to vector<8x32xf32>
      %49 = arith.addf %46, %48 : vector<8x32xf32>
      %50 = arith.addf %49, %1 : vector<8x32xf32>
      %c0_29 = arith.constant 0 : index
      %c0_30 = arith.constant 0 : index
      %51 = vector.load %arg8[%c0_29, %c0_30] : memref<1x32xf32, #tpu.memory_space<vmem>>, vector<1x32xf32>
      %c0_31 = arith.constant 0 : index
      %c0_32 = arith.constant 0 : index
      %52 = vector.load %arg9[%c0_31, %c0_32] : memref<1x32xf32, #tpu.memory_space<vmem>>, vector<1x32xf32>
      %cst_33 = arith.constant dense<0.000000e+00> : vector<8xf32>
      %53 = vector.multi_reduction <add>, %50, %cst_33 [1] : vector<8x32xf32> to vector<8xf32>
      %54 = vector.shape_cast %53 : vector<8xf32> to vector<8x1xf32>
      %cst_34 = arith.constant 3.200000e+01 : f32
      %55 = vector.broadcast %cst_34 : f32 to vector<8x1xf32>
      %56 = arith.divf %54, %55 : vector<8x1xf32>
      %57 = vector.broadcast %56 : vector<8x1xf32> to vector<8x32xf32>
      %58 = arith.subf %50, %57 : vector<8x32xf32>
      %59 = arith.mulf %58, %58 : vector<8x32xf32>
      %cst_35 = arith.constant dense<0.000000e+00> : vector<8xf32>
      %60 = vector.multi_reduction <add>, %59, %cst_35 [1] : vector<8x32xf32> to vector<8xf32>
      %61 = vector.shape_cast %60 : vector<8xf32> to vector<8x1xf32>
      %cst_36 = arith.constant 3.200000e+01 : f32
      %62 = vector.broadcast %cst_36 : f32 to vector<8x1xf32>
      %63 = arith.divf %61, %62 : vector<8x1xf32>
      %cst_37 = arith.constant 9.99999996E-13 : f32
      %64 = vector.broadcast %cst_37 : f32 to vector<8x1xf32>
      %65 = arith.addf %63, %64 : vector<8x1xf32>
      %66 = math.rsqrt %65 : vector<8x1xf32>
      %67 = vector.broadcast %66 : vector<8x1xf32> to vector<8x32xf32>
      %68 = arith.mulf %58, %67 : vector<8x32xf32>
      %69 = vector.broadcast %51 : vector<1x32xf32> to vector<8x32xf32>
      %70 = arith.mulf %68, %69 : vector<8x32xf32>
      %71 = vector.broadcast %52 : vector<1x32xf32> to vector<8x32xf32>
      %72 = arith.addf %70, %71 : vector<8x32xf32>
      %c0_38 = arith.constant 0 : index
      %c0_39 = arith.constant 0 : index
      %c0_40 = arith.constant 0 : index
      %73 = vector.load %arg10[%c0_38, %c0_39, %c0_40] : memref<1x8x32xf32, #tpu.memory_space<vmem>>, vector<1x8x32xf32>
      %74 = vector.shape_cast %73 : vector<1x8x32xf32> to vector<8x32xf32>
      %75 = vector.shape_cast %72 : vector<8x32xf32> to vector<1x8x32xf32>
      tpu.vector_store %arg10[%c0_38, %c0_39, %c0_40], %75 {strides = array<i32>} : memref<1x8x32xf32, #tpu.memory_space<vmem>>, vector<1x8x32xf32>,
    } else {
    }
    return
  }
  func.func @transform_0(%arg0: i32, %arg1: i32) -> (i32, i32, i32) {
    %c0_i32 = arith.constant 0 : i32
    %c0_i32_0 = arith.constant 0 : i32
    %c0_i32_1 = arith.constant 0 : i32
    return %arg0, %c0_i32, %c0_i32_0 : i32, i32, i32
  }
  func.func @transform_1(%arg0: i32, %arg1: i32) -> (i32, i32, i32) {
    %c0_i32 = arith.constant 0 : i32
    %c0_i32_0 = arith.constant 0 : i32
    %c0_i32_1 = arith.constant 0 : i32
    return %arg0, %c0_i32, %c0_i32_0 : i32, i32, i32
  }
  func.func @transform_2(%arg0: i32, %arg1: i32) -> (i32, i32, i32) {
    %c0_i32 = arith.constant 0 : i32
    %c0_i32_0 = arith.constant 0 : i32
    %c0_i32_1 = arith.constant 0 : i32
    return %arg1, %c0_i32, %c0_i32_0 : i32, i32, i32
  }
  func.func @transform_3(%arg0: i32, %arg1: i32) -> (i32, i32, i32) {
    %c0_i32 = arith.constant 0 : i32
    %c0_i32_0 = arith.constant 0 : i32
    %c0_i32_1 = arith.constant 0 : i32
    return %arg1, %c0_i32, %c0_i32_0 : i32, i32, i32
  }
  func.func @transform_4(%arg0: i32, %arg1: i32) -> (i32, i32, i32) {
    %c0_i32 = arith.constant 0 : i32
    %c0_i32_0 = arith.constant 0 : i32
    %c0_i32_1 = arith.constant 0 : i32
    return %arg1, %c0_i32, %c0_i32_0 : i32, i32, i32
  }
  func.func @transform_5(%arg0: i32, %arg1: i32) -> (i32, i32) {
    %c0_i32 = arith.constant 0 : i32
    %c0_i32_0 = arith.constant 0 : i32
    %c0_i32_1 = arith.constant 0 : i32
    return %c0_i32, %c0_i32_0 : i32, i32
  }
  func.func @transform_6(%arg0: i32, %arg1: i32) -> (i32, i32) {
    %c0_i32 = arith.constant 0 : i32
    %c0_i32_0 = arith.constant 0 : i32
    %c0_i32_1 = arith.constant 0 : i32
    return %c0_i32, %c0_i32_0 : i32, i32
  }
  func.func @transform_7(%arg0: i32, %arg1: i32) -> (i32, i32) {
    %c0_i32 = arith.constant 0 : i32
    %c0_i32_0 = arith.constant 0 : i32
    %c0_i32_1 = arith.constant 0 : i32
    return %c0_i32, %c0_i32_0 : i32, i32
  }
  func.func @transform_8(%arg0: i32, %arg1: i32) -> (i32, i32, i32) {
    %c0_i32 = arith.constant 0 : i32
    %c0_i32_0 = arith.constant 0 : i32
    %c0_i32_1 = arith.constant 0 : i32
    return %arg0, %c0_i32, %c0_i32_0 : i32, i32, i32
  }
}

module attributes {stable_mosaic.version = 11 : i64} {
  func.func @ffn_kernel(%arg0: i32, %arg1: i32, %arg2: memref<16x32xf32, #tpu.memory_space<vmem>>, %arg3: memref<32x64xbf16, #tpu.memory_space<vmem>>, %arg4: memref<1x64xf32, #tpu.memory_space<vmem>>, %arg5: memref<64x32xbf16, #tpu.memory_space<vmem>>, %arg6: memref<1x32xf32, #tpu.memory_space<vmem>>, %arg7: memref<1x32xf32, #tpu.memory_space<vmem>>, %arg8: memref<1x32xf32, #tpu.memory_space<vmem>>, %arg9: memref<16x32xf32, #tpu.memory_space<vmem>>, %arg10: memref<16x32xf32, #tpu.memory_space<vmem>>) attributes {dimension_semantics = [#tpu.dimension_semantics<parallel>, #tpu.dimension_semantics<arbitrary>], iteration_bounds = array<i64: 1, 1>, scalar_prefetch = 0 : i64, scratch_operands = 1 : i64, tpu.core_type = #tpu.core_type<tc>, window_params = [{transform_indices = @transform_0, window_bounds = array<i64: 16, 32>}, {transform_indices = @transform_1, window_bounds = array<i64: 32, 64>}, {transform_indices = @transform_2, window_bounds = array<i64: 1, 64>}, {transform_indices = @transform_3, window_bounds = array<i64: 64, 32>}, {pipeline_mode = #tpu.pipeline_mode<synchronous>, transform_indices = @transform_4, window_bounds = array<i64: 1, 32>}, {pipeline_mode = #tpu.pipeline_mode<synchronous>, transform_indices = @transform_5, window_bounds = array<i64: 1, 32>}, {pipeline_mode = #tpu.pipeline_mode<synchronous>, transform_indices = @transform_6, window_bounds = array<i64: 1, 32>}, {transform_indices = @transform_7, window_bounds = array<i64: 16, 32>}]} {
    %c0 = arith.constant 0 : index
    %c0_0 = arith.constant 0 : index
    %0 = vector.load %arg2[%c0, %c0_0] : memref<16x32xf32, #tpu.memory_space<vmem>>, vector<16x32xf32>
    %1 = arith.truncf %0 : vector<16x32xf32> to vector<16x32xbf16>
    %c0_1 = arith.constant 0 : index
    %c0_2 = arith.constant 0 : index
    %2 = vector.load %arg3[%c0_1, %c0_2] : memref<32x64xbf16, #tpu.memory_space<vmem>>, vector<32x64xbf16>
    %cst = arith.constant dense<0.000000e+00> : vector<16x64xf32>
    %3 = tpu.matmul %1, %2, %cst {dimension_numbers = #tpu.dot_dimension_numbers<[1], [0], [0], [1], [0, 0, 1, 1], [], []>} : vector<16x32xbf16>, vector<32x64xbf16>, vector<16x64xf32> -> vector<16x64xf32>
    %c0_3 = arith.constant 0 : index
    %c0_4 = arith.constant 0 : index
    %4 = vector.load %arg4[%c0_3, %c0_4] : memref<1x64xf32, #tpu.memory_space<vmem>>, vector<1x64xf32>
    %5 = vector.broadcast %4 : vector<1x64xf32> to vector<16x64xf32>
    %6 = arith.addf %3, %5 : vector<16x64xf32>
    %cst_5 = arith.constant 5.000000e-01 : f32
    %7 = vector.broadcast %cst_5 : f32 to vector<16x64xf32>
    %8 = arith.mulf %7, %6 : vector<16x64xf32>
    %cst_6 = arith.constant 4.471500e-02 : f32
    %9 = vector.broadcast %cst_6 : f32 to vector<16x64xf32>
    %10 = arith.mulf %9, %6 : vector<16x64xf32>
    %11 = arith.mulf %10, %6 : vector<16x64xf32>
    %12 = arith.mulf %11, %6 : vector<16x64xf32>
    %13 = arith.addf %6, %12 : vector<16x64xf32>
    %cst_7 = arith.constant 0.797884583 : f32
    %14 = vector.broadcast %cst_7 : f32 to vector<16x64xf32>
    %15 = arith.mulf %14, %13 : vector<16x64xf32>
    %16 = math.tanh %15 : vector<16x64xf32>
    %cst_8 = arith.constant 1.000000e+00 : f32
    %17 = vector.broadcast %cst_8 : f32 to vector<16x64xf32>
    %18 = arith.addf %17, %16 : vector<16x64xf32>
    %19 = arith.mulf %8, %18 : vector<16x64xf32>
    %20 = arith.truncf %19 : vector<16x64xf32> to vector<16x64xbf16>
    %c0_9 = arith.constant 0 : index
    %c0_10 = arith.constant 0 : index
    %21 = vector.load %arg5[%c0_9, %c0_10] : memref<64x32xbf16, #tpu.memory_space<vmem>>, vector<64x32xbf16>
    %cst_11 = arith.constant dense<0.000000e+00> : vector<16x32xf32>
    %22 = tpu.matmul %20, %21, %cst_11 {dimension_numbers = #tpu.dot_dimension_numbers<[1], [0], [0], [1], [0, 0, 1, 1], [], []>} : vector<16x64xbf16>, vector<64x32xbf16>, vector<16x32xf32> -> vector<16x32xf32>
    %c0_12 = arith.constant 0 : index
    %c0_13 = arith.constant 0 : index
    %23 = vector.load %arg6[%c0_12, %c0_13] : memref<1x32xf32, #tpu.memory_space<vmem>>, vector<1x32xf32>
    %24 = vector.broadcast %23 : vector<1x32xf32> to vector<16x32xf32>
    %25 = arith.addf %22, %24 : vector<16x32xf32>
    %26 = arith.addf %25, %0 : vector<16x32xf32>
    %c0_14 = arith.constant 0 : index
    %c0_15 = arith.constant 0 : index
    %27 = vector.load %arg7[%c0_14, %c0_15] : memref<1x32xf32, #tpu.memory_space<vmem>>, vector<1x32xf32>
    %c0_16 = arith.constant 0 : index
    %c0_17 = arith.constant 0 : index
    %28 = vector.load %arg8[%c0_16, %c0_17] : memref<1x32xf32, #tpu.memory_space<vmem>>, vector<1x32xf32>
    %cst_18 = arith.constant dense<0.000000e+00> : vector<16xf32>
    %29 = vector.multi_reduction <add>, %26, %cst_18 [1] : vector<16x32xf32> to vector<16xf32>
    %30 = vector.shape_cast %29 : vector<16xf32> to vector<16x1xf32>
    %cst_19 = arith.constant 3.200000e+01 : f32
    %31 = vector.broadcast %cst_19 : f32 to vector<16x1xf32>
    %32 = arith.divf %30, %31 : vector<16x1xf32>
    %33 = vector.broadcast %32 : vector<16x1xf32> to vector<16x32xf32>
    %34 = arith.subf %26, %33 : vector<16x32xf32>
    %35 = arith.mulf %34, %34 : vector<16x32xf32>
    %cst_20 = arith.constant dense<0.000000e+00> : vector<16xf32>
    %36 = vector.multi_reduction <add>, %35, %cst_20 [1] : vector<16x32xf32> to vector<16xf32>
    %37 = vector.shape_cast %36 : vector<16xf32> to vector<16x1xf32>
    %cst_21 = arith.constant 3.200000e+01 : f32
    %38 = vector.broadcast %cst_21 : f32 to vector<16x1xf32>
    %39 = arith.divf %37, %38 : vector<16x1xf32>
    %cst_22 = arith.constant 9.99999996E-13 : f32
    %40 = vector.broadcast %cst_22 : f32 to vector<16x1xf32>
    %41 = arith.addf %39, %40 : vector<16x1xf32>
    %42 = math.rsqrt %41 : vector<16x1xf32>
    %43 = vector.broadcast %42 : vector<16x1xf32> to vector<16x32xf32>
    %44 = arith.mulf %34, %43 : vector<16x32xf32>
    %45 = vector.broadcast %27 : vector<1x32xf32> to vector<16x32xf32>
    %46 = arith.mulf %44, %45 : vector<16x32xf32>
    %47 = vector.broadcast %28 : vector<1x32xf32> to vector<16x32xf32>
    %48 = arith.addf %46, %47 : vector<16x32xf32>
    %c0_23 = arith.constant 0 : index
    %c0_24 = arith.constant 0 : index
    %49 = vector.load %arg9[%c0_23, %c0_24] : memref<16x32xf32, #tpu.memory_space<vmem>>, vector<16x32xf32>
    tpu.vector_store %arg9[%c0_23, %c0_24], %48 {strides = array<i32>} : memref<16x32xf32, #tpu.memory_space<vmem>>, vector<16x32xf32>,
    return
  }
  func.func @transform_0(%arg0: i32, %arg1: i32) -> (i32, i32) {
    %c0_i32 = arith.constant 0 : i32
    %c0_i32_0 = arith.constant 0 : i32
    return %arg0, %c0_i32 : i32, i32
  }
  func.func @transform_1(%arg0: i32, %arg1: i32) -> (i32, i32) {
    %c0_i32 = arith.constant 0 : i32
    %c0_i32_0 = arith.constant 0 : i32
    return %c0_i32, %arg1 : i32, i32
  }
  func.func @transform_2(%arg0: i32, %arg1: i32) -> (i32, i32) {
    %c0_i32 = arith.constant 0 : i32
    %c0_i32_0 = arith.constant 0 : i32
    return %c0_i32, %arg1 : i32, i32
  }
  func.func @transform_3(%arg0: i32, %arg1: i32) -> (i32, i32) {
    %c0_i32 = arith.constant 0 : i32
    %c0_i32_0 = arith.constant 0 : i32
    return %arg1, %c0_i32 : i32, i32
  }
  func.func @transform_4(%arg0: i32, %arg1: i32) -> (i32, i32) {
    %c0_i32 = arith.constant 0 : i32
    %c0_i32_0 = arith.constant 0 : i32
    %c0_i32_1 = arith.constant 0 : i32
    return %c0_i32, %c0_i32_0 : i32, i32
  }
  func.func @transform_5(%arg0: i32, %arg1: i32) -> (i32, i32) {
    %c0_i32 = arith.constant 0 : i32
    %c0_i32_0 = arith.constant 0 : i32
    %c0_i32_1 = arith.constant 0 : i32
    return %c0_i32, %c0_i32_0 : i32, i32
  }
  func.func @transform_6(%arg0: i32, %arg1: i32) -> (i32, i32) {
    %c0_i32 = arith.constant 0 : i32
    %c0_i32_0 = arith.constant 0 : i32
    %c0_i32_1 = arith.constant 0 : i32
    return %c0_i32, %c0_i32_0 : i32, i32
  }
  func.func @transform_7(%arg0: i32, %arg1: i32) -> (i32, i32) {
    %c0_i32 = arith.constant 0 : i32
    %c0_i32_0 = arith.constant 0 : i32
    return %arg0, %c0_i32 : i32, i32
  }
}

module attributes {stable_mosaic.version = 11 : i64} {
  func.func @ffn_kernel(%arg0: i32, %arg1: i32, %arg2: memref<16x32xf32, #tpu.memory_space<vmem>>, %arg3: memref<32x64xbf16, #tpu.memory_space<vmem>>, %arg4: memref<1x64xf32, #tpu.memory_space<vmem>>, %arg5: memref<64x32xbf16, #tpu.memory_space<vmem>>, %arg6: memref<1x32xf32, #tpu.memory_space<vmem>>, %arg7: memref<1x32xf32, #tpu.memory_space<vmem>>, %arg8: memref<1x32xf32, #tpu.memory_space<vmem>>, %arg9: memref<16x32xf32, #tpu.memory_space<vmem>>, %arg10: memref<16x32xf32, #tpu.memory_space<vmem>>) attributes {dimension_semantics = [#tpu.dimension_semantics<parallel>, #tpu.dimension_semantics<arbitrary>], iteration_bounds = array<i64: 1, 1>, scalar_prefetch = 0 : i64, scratch_operands = 1 : i64, tpu.core_type = #tpu.core_type<tc>, window_params = [{transform_indices = @transform_0, window_bounds = array<i64: 16, 32>}, {transform_indices = @transform_1, window_bounds = array<i64: 32, 64>}, {transform_indices = @transform_2, window_bounds = array<i64: 1, 64>}, {transform_indices = @transform_3, window_bounds = array<i64: 64, 32>}, {pipeline_mode = #tpu.pipeline_mode<synchronous>, transform_indices = @transform_4, window_bounds = array<i64: 1, 32>}, {pipeline_mode = #tpu.pipeline_mode<synchronous>, transform_indices = @transform_5, window_bounds = array<i64: 1, 32>}, {pipeline_mode = #tpu.pipeline_mode<synchronous>, transform_indices = @transform_6, window_bounds = array<i64: 1, 32>}, {transform_indices = @transform_7, window_bounds = array<i64: 16, 32>}]} {
    %c0 = arith.constant 0 : index
    %c0_0 = arith.constant 0 : index
    %0 = vector.load %arg2[%c0, %c0_0] : memref<16x32xf32, #tpu.memory_space<vmem>>, vector<16x32xf32>
    %1 = arith.truncf %0 : vector<16x32xf32> to vector<16x32xbf16>
    %c0_1 = arith.constant 0 : index
    %c0_2 = arith.constant 0 : index
    %2 = vector.load %arg3[%c0_1, %c0_2] : memref<32x64xbf16, #tpu.memory_space<vmem>>, vector<32x64xbf16>
    %cst = arith.constant dense<0.000000e+00> : vector<16x64xf32>
    %3 = tpu.matmul %1, %2, %cst {dimension_numbers = #tpu.dot_dimension_numbers<[1], [0], [0], [1], [0, 0, 1, 1], [], []>} : vector<16x32xbf16>, vector<32x64xbf16>, vector<16x64xf32> -> vector<16x64xf32>
    %c0_3 = arith.constant 0 : index
    %c0_4 = arith.constant 0 : index
    %4 = vector.load %arg4[%c0_3, %c0_4] : memref<1x64xf32, #tpu.memory_space<vmem>>, vector<1x64xf32>
    %5 = vector.broadcast %4 : vector<1x64xf32> to vector<16x64xf32>
    %6 = arith.addf %3, %5 : vector<16x64xf32>
    %cst_5 = arith.constant 5.000000e-01 : f32
    %7 = vector.broadcast %cst_5 : f32 to vector<16x64xf32>
    %8 = arith.mulf %7, %6 : vector<16x64xf32>
    %cst_6 = arith.constant 4.471500e-02 : f32
    %9 = vector.broadcast %cst_6 : f32 to vector<16x64xf32>
    %10 = arith.mulf %9, %6 : vector<16x64xf32>
    %11 = arith.mulf %10, %6 : vector<16x64xf32>
    %12 = arith.mulf %11, %6 : vector<16x64xf32>
    %13 = arith.addf %6, %12 : vector<16x64xf32>
    %cst_7 = arith.constant 0.797884583 : f32
    %14 = vector.broadcast %cst_7 : f32 to vector<16x64xf32>
    %15 = arith.mulf %14, %13 : vector<16x64xf32>
    %16 = math.tanh %15 : vector<16x64xf32>
    %cst_8 = arith.constant 1.000000e+00 : f32
    %17 = vector.broadcast %cst_8 : f32 to vector<16x64xf32>
    %18 = arith.addf %17, %16 : vector<16x64xf32>
    %19 = arith.mulf %8, %18 : vector<16x64xf32>
    %20 = arith.truncf %19 : vector<16x64xf32> to vector<16x64xbf16>
    %c0_9 = arith.constant 0 : index
    %c0_10 = arith.constant 0 : index
    %21 = vector.load %arg5[%c0_9, %c0_10] : memref<64x32xbf16, #tpu.memory_space<vmem>>, vector<64x32xbf16>
    %cst_11 = arith.constant dense<0.000000e+00> : vector<16x32xf32>
    %22 = tpu.matmul %20, %21, %cst_11 {dimension_numbers = #tpu.dot_dimension_numbers<[1], [0], [0], [1], [0, 0, 1, 1], [], []>} : vector<16x64xbf16>, vector<64x32xbf16>, vector<16x32xf32> -> vector<16x32xf32>
    %c0_12 = arith.constant 0 : index
    %c0_13 = arith.constant 0 : index
    %23 = vector.load %arg6[%c0_12, %c0_13] : memref<1x32xf32, #tpu.memory_space<vmem>>, vector<1x32xf32>
    %24 = vector.broadcast %23 : vector<1x32xf32> to vector<16x32xf32>
    %25 = arith.addf %22, %24 : vector<16x32xf32>
    %26 = arith.addf %25, %0 : vector<16x32xf32>
    %c0_14 = arith.constant 0 : index
    %c0_15 = arith.constant 0 : index
    %27 = vector.load %arg7[%c0_14, %c0_15] : memref<1x32xf32, #tpu.memory_space<vmem>>, vector<1x32xf32>
    %c0_16 = arith.constant 0 : index
    %c0_17 = arith.constant 0 : index
    %28 = vector.load %arg8[%c0_16, %c0_17] : memref<1x32xf32, #tpu.memory_space<vmem>>, vector<1x32xf32>
    %cst_18 = arith.constant dense<0.000000e+00> : vector<16xf32>
    %29 = vector.multi_reduction <add>, %26, %cst_18 [1] : vector<16x32xf32> to vector<16xf32>
    %30 = vector.shape_cast %29 : vector<16xf32> to vector<16x1xf32>
    %cst_19 = arith.constant 3.200000e+01 : f32
    %31 = vector.broadcast %cst_19 : f32 to vector<16x1xf32>
    %32 = arith.divf %30, %31 : vector<16x1xf32>
    %33 = vector.broadcast %32 : vector<16x1xf32> to vector<16x32xf32>
    %34 = arith.subf %26, %33 : vector<16x32xf32>
    %35 = arith.mulf %34, %34 : vector<16x32xf32>
    %cst_20 = arith.constant dense<0.000000e+00> : vector<16xf32>
    %36 = vector.multi_reduction <add>, %35, %cst_20 [1] : vector<16x32xf32> to vector<16xf32>
    %37 = vector.shape_cast %36 : vector<16xf32> to vector<16x1xf32>
    %cst_21 = arith.constant 3.200000e+01 : f32
    %38 = vector.broadcast %cst_21 : f32 to vector<16x1xf32>
    %39 = arith.divf %37, %38 : vector<16x1xf32>
    %cst_22 = arith.constant 9.99999996E-13 : f32
    %40 = vector.broadcast %cst_22 : f32 to vector<16x1xf32>
    %41 = arith.addf %39, %40 : vector<16x1xf32>
    %42 = math.rsqrt %41 : vector<16x1xf32>
    %43 = vector.broadcast %42 : vector<16x1xf32> to vector<16x32xf32>
    %44 = arith.mulf %34, %43 : vector<16x32xf32>
    %45 = vector.broadcast %27 : vector<1x32xf32> to vector<16x32xf32>
    %46 = arith.mulf %44, %45 : vector<16x32xf32>
    %47 = vector.broadcast %28 : vector<1x32xf32> to vector<16x32xf32>
    %48 = arith.addf %46, %47 : vector<16x32xf32>
    %c0_23 = arith.constant 0 : index
    %c0_24 = arith.constant 0 : index
    %49 = vector.load %arg9[%c0_23, %c0_24] : memref<16x32xf32, #tpu.memory_space<vmem>>, vector<16x32xf32>
    tpu.vector_store %arg9[%c0_23, %c0_24], %48 {strides = array<i32>} : memref<16x32xf32, #tpu.memory_space<vmem>>, vector<16x32xf32>,
    return
  }
  func.func @transform_0(%arg0: i32, %arg1: i32) -> (i32, i32) {
    %c0_i32 = arith.constant 0 : i32
    %c0_i32_0 = arith.constant 0 : i32
    return %arg0, %c0_i32 : i32, i32
  }
  func.func @transform_1(%arg0: i32, %arg1: i32) -> (i32, i32) {
    %c0_i32 = arith.constant 0 : i32
    %c0_i32_0 = arith.constant 0 : i32
    return %c0_i32, %arg1 : i32, i32
  }
  func.func @transform_2(%arg0: i32, %arg1: i32) -> (i32, i32) {
    %c0_i32 = arith.constant 0 : i32
    %c0_i32_0 = arith.constant 0 : i32
    return %c0_i32, %arg1 : i32, i32
  }
  func.func @transform_3(%arg0: i32, %arg1: i32) -> (i32, i32) {
    %c0_i32 = arith.constant 0 : i32
    %c0_i32_0 = arith.constant 0 : i32
    return %arg1, %c0_i32 : i32, i32
  }
  func.func @transform_4(%arg0: i32, %arg1: i32) -> (i32, i32) {
    %c0_i32 = arith.constant 0 : i32
    %c0_i32_0 = arith.constant 0 : i32
    %c0_i32_1 = arith.constant 0 : i32
    return %c0_i32, %c0_i32_0 : i32, i32
  }
  func.func @transform_5(%arg0: i32, %arg1: i32) -> (i32, i32) {
    %c0_i32 = arith.constant 0 : i32
    %c0_i32_0 = arith.constant 0 : i32
    %c0_i32_1 = arith.constant 0 : i32
    return %c0_i32, %c0_i32_0 : i32, i32
  }
  func.func @transform_6(%arg0: i32, %arg1: i32) -> (i32, i32) {
    %c0_i32 = arith.constant 0 : i32
    %c0_i32_0 = arith.constant 0 : i32
    %c0_i32_1 = arith.constant 0 : i32
    return %c0_i32, %c0_i32_0 : i32, i32
  }
  func.func @transform_7(%arg0: i32, %arg1: i32) -> (i32, i32) {
    %c0_i32 = arith.constant 0 : i32
    %c0_i32_0 = arith.constant 0 : i32
    return %arg0, %c0_i32 : i32, i32
  }
}

</mosaic_0001>

<llo_original>
// kernel: transformer_base_model.5
$region0: #{transformer_base_model.5}
  #allocation0 [shape = 'u32[]', space=smem, size = 0x4, offset = 0x4, fixed_abs, tag = 'smem constant byte address 0x4 - core index']
  #allocation1 [shape = 'u32[144,128]{1,0:T(1,128)}', space=vmem, size = 0x12000, scoped, tag = 'internal scratch']
  %s0 = inlined_call_operand.vmem [shape: f32[2,8,32], index: 0, kind: input, shape index: {}]
  %s1 = inlined_call_operand.vmem [shape: f32[2,8,32], index: 1, kind: input, shape index: {}]
  %s2 = inlined_call_operand.vmem [shape: f32[2,8,32], index: 2, kind: input, shape index: {}]
  %s3 = inlined_call_operand.vmem [shape: f32[1,32], index: 3, kind: input, shape index: {}]
  %s4 = inlined_call_operand.vmem [shape: f32[1,32], index: 4, kind: input, shape index: {}]
  %s5 = inlined_call_operand.vmem [shape: f32[2,8,32], index: 5, kind: output, shape index: {}]
  %s6 = sld [smem:[#allocation0]]
  $region53: #{transformer_base_model.5} parent=0
    _
  %s8 = ssub.s32 1, %s6
  %s9 = scalar_select 0, %s8, %s6
  loop: start=0, step=1, limit=4
  $region2: #{transformer_base_model.5} parent=0 // loop_pre_header
    _
  $region3: #{transformer_base_model.5} parent=0 // loop_header
    %s11 = sphi 0, %s15
    %p12 = scmp.ge.s32.totalorder %s11, 4
    %s21 = sphi 0, %s23
    %s24 = sphi 0, %s21
    %s25 = sphi 0, %s24
    %s41 = sphi 0, %s25
    %s47 = sphi 0, %s49
    %s50 = sphi 0, %s47
    %s51 = sphi 0, %s50
    %s67 = sphi 0, %s51
    %s73 = sphi 0, %s75
    %s76 = sphi 0, %s73
    %s77 = sphi 0, %s76
    %s93 = sphi 0, %s77
    %s97 = sphi 0, %s97
    %s99 = sphi 0, %s97
    %s100 = sphi 0, %s99
    %s114 = sphi 0, %s100
    %s118 = sphi 0, %s118
    %s120 = sphi 0, %s118
    %s121 = sphi 0, %s120
    %s135 = sphi 0, %s121
    %s141 = sphi 0, %s143
    %s144 = sphi 0, %s141
    %s145 = sphi 0, %s144
    %s161 = sphi 0, %s145
  $region4: #{transformer_base_model.5} parent=0 // loop_header_branch
    %14 = sbr.rel (%p12) target = $region8
  $region5: #{transformer_base_model.5} parent=0 // loop_body
    %s16 = ssub.s32 %s11, 1
    %s17 = ssub.s32 %s11, 2
    %s18 = sadd.s32 %s11, 1
    %s19 = ssub.s32 %s11, %s18
    %p20 = scmp.eq.s32.totalorder %s19, 0
    %s22 = sadd.s32 %s21, 1
    %s23 = scalar_select %p20, %s21, %s22
    %p26 = pneg %p20
    %p27 = scmp.eq.s32.totalorder %s11, 1
    %p28 = por %p26, %p27
    %p29 = scmp.ne.s32.totalorder %s21, %s24
    %p30 = scmp.eq.s32.totalorder %s11, 0
    %p31 = por %p29, %p30
    %p32 = scmp.ne.s32.totalorder %s21, %s24
    %p33 = scmp.eq.s32.totalorder %s16, 1
    %p34 = por %p32, %p33
    %p35 = scmp.ne.s32.totalorder %s24, %s25
    %p36 = scmp.eq.s32.totalorder %s16, 0
    %p37 = por %p35, %p36
    %p38 = scmp.ne.s32.totalorder %s24, %s25
    %p39 = scmp.eq.s32.totalorder %s17, 1
    %p40 = por %p38, %p39
    %p42 = scmp.ne.s32.totalorder %s25, %s41
    %p43 = scmp.eq.s32.totalorder %s17, 0
    %p44 = por %p42, %p43
    %s45 = ssub.s32 %s11, %s18
    %p46 = scmp.eq.s32.totalorder %s45, 0
    %s48 = sadd.s32 %s47, 1
    %s49 = scalar_select %p46, %s47, %s48
    %p52 = pneg %p46
    %p53 = scmp.eq.s32.totalorder %s11, 1
    %p54 = por %p52, %p53
    %p55 = scmp.ne.s32.totalorder %s47, %s50
    %p56 = scmp.eq.s32.totalorder %s11, 0
    %p57 = por %p55, %p56
    %p58 = scmp.ne.s32.totalorder %s47, %s50
    %p59 = scmp.eq.s32.totalorder %s16, 1
    %p60 = por %p58, %p59
    %p61 = scmp.ne.s32.totalorder %s50, %s51
    %p62 = scmp.eq.s32.totalorder %s16, 0
    %p63 = por %p61, %p62
    %p64 = scmp.ne.s32.totalorder %s50, %s51
    %p65 = scmp.eq.s32.totalorder %s17, 1
    %p66 = por %p64, %p65
    %p68 = scmp.ne.s32.totalorder %s51, %s67
    %p69 = scmp.eq.s32.totalorder %s17, 0
    %p70 = por %p68, %p69
    %s71 = ssub.s32 %s11, %s18
    %p72 = scmp.eq.s32.totalorder %s71, 0
    %s74 = sadd.s32 %s73, 1
    %s75 = scalar_select %p72, %s73, %s74
    %p78 = pneg %p72
    %p79 = scmp.eq.s32.totalorder %s11, 1
    %p80 = por %p78, %p79
    %p81 = scmp.ne.s32.totalorder %s73, %s76
    %p82 = scmp.eq.s32.totalorder %s11, 0
    %p83 = por %p81, %p82
    %p84 = scmp.ne.s32.totalorder %s73, %s76
    %p85 = scmp.eq.s32.totalorder %s16, 1
    %p86 = por %p84, %p85
    %p87 = scmp.ne.s32.totalorder %s76, %s77
    %p88 = scmp.eq.s32.totalorder %s16, 0
    %p89 = por %p87, %p88
    %p90 = scmp.ne.s32.totalorder %s76, %s77
    %p91 = scmp.eq.s32.totalorder %s17, 1
    %p92 = por %p90, %p91
    %p94 = scmp.ne.s32.totalorder %s77, %s93
    %p95 = scmp.eq.s32.totalorder %s17, 0
    %p96 = por %p94, %p95
    %s98 = sadd.s32 %s97, 1
    %p101 = scmp.eq.s32.totalorder %s11, 1
    %p102 = scmp.ne.s32.totalorder %s97, %s99
    %p103 = scmp.eq.s32.totalorder %s11, 0
    %p104 = por %p102, %p103
    %p105 = scmp.ne.s32.totalorder %s97, %s99
    %p106 = scmp.eq.s32.totalorder %s16, 1
    %p107 = por %p105, %p106
    %p108 = scmp.ne.s32.totalorder %s99, %s100
    %p109 = scmp.eq.s32.totalorder %s16, 0
    %p110 = por %p108, %p109
    %p111 = scmp.ne.s32.totalorder %s99, %s100
    %p112 = scmp.eq.s32.totalorder %s17, 1
    %p113 = por %p111, %p112
    %p115 = scmp.ne.s32.totalorder %s100, %s114
    %p116 = scmp.eq.s32.totalorder %s17, 0
    %p117 = por %p115, %p116
    %s119 = sadd.s32 %s118, 1
    %p122 = scmp.eq.s32.totalorder %s11, 1
    %p123 = scmp.ne.s32.totalorder %s118, %s120
    %p124 = scmp.eq.s32.totalorder %s11, 0
    %p125 = por %p123, %p124
    %p126 = scmp.ne.s32.totalorder %s118, %s120
    %p127 = scmp.eq.s32.totalorder %s16, 1
    %p128 = por %p126, %p127
    %p129 = scmp.ne.s32.totalorder %s120, %s121
    %p130 = scmp.eq.s32.totalorder %s16, 0
    %p131 = por %p129, %p130
    %p132 = scmp.ne.s32.totalorder %s120, %s121
    %p133 = scmp.eq.s32.totalorder %s17, 1
    %p134 = por %p132, %p133
    %p136 = scmp.ne.s32.totalorder %s121, %s135
    %p137 = scmp.eq.s32.totalorder %s17, 0
    %p138 = por %p136, %p137
    %s139 = ssub.s32 %s11, %s18
    %p140 = scmp.eq.s32.totalorder %s139, 0
    %s142 = sadd.s32 %s141, 1
    %s143 = scalar_select %p140, %s141, %s142
    %p146 = pneg %p140
    %p147 = scmp.eq.s32.totalorder %s11, 1
    %p148 = por %p146, %p147
    %p149 = scmp.ne.s32.totalorder %s141, %s144
    %p150 = scmp.eq.s32.totalorder %s11, 0
    %p151 = por %p149, %p150
    %p152 = scmp.ne.s32.totalorder %s141, %s144
    %p153 = scmp.eq.s32.totalorder %s16, 1
    %p154 = por %p152, %p153
    %p155 = scmp.ne.s32.totalorder %s144, %s145
    %p156 = scmp.eq.s32.totalorder %s16, 0
    %p157 = por %p155, %p156
    %p158 = scmp.ne.s32.totalorder %s144, %s145
    %p159 = scmp.eq.s32.totalorder %s17, 1
    %p160 = por %p158, %p159
    %p162 = scmp.ne.s32.totalorder %s145, %s161
    %p163 = scmp.eq.s32.totalorder %s17, 0
    %p164 = por %p162, %p163
    %p165 = scmp.le.s32.totalorder 1, %s11
    %p166 = scmp.lt.s32.totalorder %s11, 3
    %p167 = pnand %p165, %p166
    %p168 = pneg %p167
    // Predicated region
    $region9: #{transformer_base_model.5} parent=5 // pred_check
      _
    $region10: #{transformer_base_model.5} parent=5 // pred_check_branch
      %170 = sbr.rel (%p167) target = $region12
    $region11: #{transformer_base_model.5} parent=5 // pred_region
      %s171 = ssub.s32 %s11, 1
      // Predicated region
      $region13: #{transformer_base_model.5} parent=11 // pred_check
        %p172 = pneg %p110
      $region14: #{transformer_base_model.5} parent=11 // pred_check_branch
        %174 = sbr.rel (%p172) target = $region16
      $region15: #{transformer_base_model.5} parent=11 // pred_region
        _
      $region16: #{transformer_base_model.5} parent=11 // pred_fallthru
        _
      // Predicated region
      $region17: #{transformer_base_model.5} parent=11 // pred_check
        %p175 = pneg %p131
      $region18: #{transformer_base_model.5} parent=11 // pred_check_branch
        %177 = sbr.rel (%p175) target = $region20
      $region19: #{transformer_base_model.5} parent=11 // pred_region
        _
      $region20: #{transformer_base_model.5} parent=11 // pred_fallthru
        _
    $region12: #{transformer_base_model.5} parent=5 // pred_fallthru
      _
    %p178 = scmp.lt.s32.totalorder %s11, 2
    // Predicated region
    $region21: #{transformer_base_model.5} parent=5 // pred_check
      %p179 = pneg %p178
    $region22: #{transformer_base_model.5} parent=5 // pred_check_branch
      %181 = sbr.rel (%p179) target = $region24
    $region23: #{transformer_base_model.5} parent=5 // pred_region
      // Predicated region
      $region25: #{transformer_base_model.5} parent=23 // pred_check
        %p182 = pneg %p31
      $region26: #{transformer_base_model.5} parent=23 // pred_check_branch
        %184 = sbr.rel (%p182) target = $region28
      $region27: #{transformer_base_model.5} parent=23 // pred_region
        %p185 = scmp.lt.s32.totalorder %s11, 1
        %s186 = scalar_select %p185, %s11, 1
        %s187 = smul.addr %s186, 8
        %s188 = scalar_lea.vmem %s0, %s187
      $region28: #{transformer_base_model.5} parent=23 // pred_fallthru
        _
      // Predicated region
      $region29: #{transformer_base_model.5} parent=23 // pred_check
        %p189 = pneg %p57
      $region30: #{transformer_base_model.5} parent=23 // pred_check_branch
        %191 = sbr.rel (%p189) target = $region32
      $region31: #{transformer_base_model.5} parent=23 // pred_region
        %p192 = scmp.lt.s32.totalorder %s11, 1
        %s193 = scalar_select %p192, %s11, 1
        %s194 = smul.addr %s193, 8
        %s195 = scalar_lea.vmem %s1, %s194
      $region32: #{transformer_base_model.5} parent=23 // pred_fallthru
        _
      // Predicated region
      $region33: #{transformer_base_model.5} parent=23 // pred_check
        %p196 = pneg %p83
      $region34: #{transformer_base_model.5} parent=23 // pred_check_branch
        %198 = sbr.rel (%p196) target = $region36
      $region35: #{transformer_base_model.5} parent=23 // pred_region
        %p199 = scmp.lt.s32.totalorder %s11, 1
        %s200 = scalar_select %p199, %s11, 1
        %s201 = smul.addr %s200, 8
        %s202 = scalar_lea.vmem %s2, %s201
      $region36: #{transformer_base_model.5} parent=23 // pred_fallthru
        _
    $region24: #{transformer_base_model.5} parent=5 // pred_fallthru
      _
    %p203 = scmp.le.s32.totalorder 1, %s11
    %p204 = scmp.lt.s32.totalorder %s11, 3
    %p205 = pnand %p203, %p204
    %p206 = pneg %p205
    // Predicated region
    $region37: #{transformer_base_model.5} parent=5 // pred_check
      _
    $region38: #{transformer_base_model.5} parent=5 // pred_check_branch
      %208 = sbr.rel (%p205) target = $region40
    $region39: #{transformer_base_model.5} parent=5 // pred_region
      %s209 = ssub.s32 %s11, 1
      %p210 = scmp.lt.s32.totalorder %s16, 1
      %s211 = scalar_select %p210, %s16, 1
      %s212 = smul.addr %s211, 8
      %s213 = scalar_lea.vmem %s0, %s212
      %p214 = pneg %p37
      %p215 = pneg %p34
      %p216 = scmp.lt.s32.totalorder %s16, 1
      %s217 = scalar_select %p216, %s16, 1
      %s218 = smul.addr %s217, 8
      %s219 = scalar_lea.vmem %s1, %s218
      %p220 = pneg %p63
      %p221 = pneg %p60
      %p222 = scmp.lt.s32.totalorder %s16, 1
      %s223 = scalar_select %p222, %s16, 1
      %s224 = smul.addr %s223, 8
      %s225 = scalar_lea.vmem %s2, %s224
      %p226 = pneg %p89
      %p227 = pneg %p86
      %p228 = pneg %p110
      %p229 = pneg %p107
      %p230 = pneg %p131
      %p231 = pneg %p128
      %p232 = pneg %p157
      %p233 = pneg %p154
      %p234 = scmp.lt.s32.totalorder %s16, 1
      %s235 = scalar_select %p234, %s16, 1
      %s236 = smul.addr %s235, 8
      %s237 = scalar_lea.vmem %s5, %s236
      %p238 = scmp.lt.s32.totalorder %s16, 1
      %s239 = scalar_select %p238, %s16, 1
      %s240 = smul.addr %s239, 8
      %s241 = scalar_lea.vmem %s0, %s240
      %p242 = scmp.lt.s32.totalorder %s16, 1
      %s243 = scalar_select %p242, %s16, 1
      %s244 = smul.addr %s243, 8
      %s245 = scalar_lea.vmem %s1, %s244
      %p246 = scmp.lt.s32.totalorder %s16, 1
      %s247 = scalar_select %p246, %s16, 1
      %s248 = smul.addr %s247, 8
      %s249 = scalar_lea.vmem %s2, %s248
      %p250 = scmp.lt.s32.totalorder %s16, 1
      %s251 = scalar_select %p250, %s16, 1
      %s252 = smul.addr %s251, 8
      %s253 = scalar_lea.vmem %s5, %s252
      %v254 = vld [vmem:[%s241] sm:$0xff]
      %v255 = vld [vmem:[%s245] sm:$0xff]
      %v256 = vadd.f32 %v254, %v255
      %v257 = vld [vmem:[%s249] sm:$0xff]
      %v258 = vadd.f32 %v256, %v257
      %v259 = vld [vmem:[%s3] sm:$0x1]
      %v260 = vld [vmem:[%s4] sm:$0x1]
      %vm261 = vcmask 261120
      %v262 = vsel %vm261, %v258, 0.0
      %263 = vadd.xlane.f32.xlu0 %v262
      %v264 = vpop.xlane.xlu0 %263
      %v265 = vrcp.pop 32.0
      %v266 = vmul.f32 %v264, %v265
      %v267 = vsub.f32 %v258, %v266
      %v268 = vmul.f32 %v267, %v267
      %v269 = vsel %vm261, %v268, 0.0
      %270 = vadd.xlane.f32.xlu0 %v269
      %v271 = vpop.xlane.xlu0 %270
      %v272 = vmul.f32 %v271, %v265
      %v273 = vadd.f32 %v272, 1e-12
      %v274 = vrsqrt.pop %v273
      %v275 = vmul.f32 %v267, %v274
      %v277 = vlaneseq
      %v278 = vshrl.u32 %v277, 7
      %v279 = vsub.s32 0, %v278
      %v280 = vrot.slane %v259, %v279
      %v282 = vmul.f32 %v275, %v280
      %v284 = vlaneseq
      %v285 = vshrl.u32 %v284, 7
      %v286 = vsub.s32 0, %v285
      %v287 = vrot.slane %v260, %v286
      %v289 = vadd.f32 %v282, %v287
      %290 = vst.msk [vmem:[%s253] sm:$0xff] %vm261, %v289
      %p291 = scmp.lt.s32.totalorder %s16, 1
      %s292 = scalar_select %p291, %s16, 1
      %s293 = smul.addr %s292, 8
      %s294 = scalar_lea.vmem %s5, %s293
      // Predicated region
      $region41: #{transformer_base_model.5} parent=39 // pred_check
        %p295 = pneg %p154
      $region42: #{transformer_base_model.5} parent=39 // pred_check_branch
        %297 = sbr.rel (%p295) target = $region44
      $region43: #{transformer_base_model.5} parent=39 // pred_region
        _
      $region44: #{transformer_base_model.5} parent=39 // pred_fallthru
        _
    $region40: #{transformer_base_model.5} parent=5 // pred_fallthru
      _
    %p298 = scmp.le.s32.totalorder 2, %s11
    // Predicated region
    $region45: #{transformer_base_model.5} parent=5 // pred_check
      %p299 = pneg %p298
    $region46: #{transformer_base_model.5} parent=5 // pred_check_branch
      %301 = sbr.rel (%p299) target = $region48
    $region47: #{transformer_base_model.5} parent=5 // pred_region
      %s302 = ssub.s32 %s11, 2
      // Predicated region
      $region49: #{transformer_base_model.5} parent=47 // pred_check
        %p303 = pneg %p160
      $region50: #{transformer_base_model.5} parent=47 // pred_check_branch
        %305 = sbr.rel (%p303) target = $region52
      $region51: #{transformer_base_model.5} parent=47 // pred_region
        %p306 = scmp.lt.s32.totalorder %s17, 1
        %s307 = scalar_select %p306, %s17, 1
        %s308 = smul.addr %s307, 8
        %s309 = scalar_lea.vmem %s5, %s308
      $region52: #{transformer_base_model.5} parent=47 // pred_fallthru
        _
    $region48: #{transformer_base_model.5} parent=5 // pred_fallthru
      _
  $region6: #{transformer_base_model.5} parent=0 // loop_footer
    %s15 = sadd.s32 1, %s11
  $region7: #{transformer_base_model.5} parent=0 // loop_footer_branch
    %10 = sbr.rel target = $region3
  $region8: #{transformer_base_model.5} parent=0 // loop_exit
    _

// kernel: transformer_base_model.9
$region0: #{transformer_base_model.9}
  #allocation0 [shape = 'u32[]', space=smem, size = 0x4, offset = 0x4, fixed_abs, tag = 'smem constant byte address 0x4 - core index']
  #allocation1 [shape = 'u32[144,128]{1,0:T(1,128)}', space=vmem, size = 0x12000, scoped, tag = 'internal scratch']
  #allocation2 [shape = 'f32[16,32]{1,0:T(8,128)}', space=vmem, size = 0x2000, scoped, tag = 'scratch operand']
  %s0 = inlined_call_operand.vmem [shape: f32[16,32], index: 0, kind: input, shape index: {}]
  %s1 = inlined_call_operand.vmem [shape: bf16[32,64], index: 1, kind: input, shape index: {}]
  %s2 = inlined_call_operand.vmem [shape: f32[1,64], index: 2, kind: input, shape index: {}]
  %s3 = inlined_call_operand.vmem [shape: bf16[64,32], index: 3, kind: input, shape index: {}]
  %s4 = inlined_call_operand.vmem [shape: f32[1,32], index: 4, kind: input, shape index: {}]
  %s5 = inlined_call_operand.vmem [shape: f32[1,32], index: 5, kind: input, shape index: {}]
  %s6 = inlined_call_operand.vmem [shape: f32[1,32], index: 6, kind: input, shape index: {}]
  %s7 = inlined_call_operand.hbm [shape: f32[16,32], index: 7, kind: output, shape index: {}]
  %s8 = sld [smem:[#allocation0]]
  $region38: #{transformer_base_model.9} parent=0
    _
  %s10 = ssub.s32 1, %s8
  %s11 = scalar_select 0, %s10, %s8
  $region1: #{transformer_base_model.9} parent=0
    #allocation3 [shape = 'u8[8192]{0}', space=vmem, size = 0x2000, scoped, tag = 'output window, operand 0, single buffered']
    #allocation4 [shape = 's32[1]{0}', space=sflag, size = 0x4, scoped, tag = 'scoped memory for transformer_base_model.9']
    %12 = vsyncpa [#allocation4], 0
    // Predicated region
    $region2: #{transformer_base_model.9} parent=1 // pred_check
      _
    $region3: #{transformer_base_model.9} parent=1 // pred_check_branch
      %14 = sbr.rel (0) target = $region5
    $region4: #{transformer_base_model.9} parent=1 // pred_region
      _
    $region5: #{transformer_base_model.9} parent=1 // pred_fallthru
      _
    // Predicated region
    $region6: #{transformer_base_model.9} parent=1 // pred_check
      _
    $region7: #{transformer_base_model.9} parent=1 // pred_check_branch
      %16 = sbr.rel (0) target = $region9
    $region8: #{transformer_base_model.9} parent=1 // pred_region
      _
    $region9: #{transformer_base_model.9} parent=1 // pred_fallthru
      _
    // Predicated region
    $region10: #{transformer_base_model.9} parent=1 // pred_check
      _
    $region11: #{transformer_base_model.9} parent=1 // pred_check_branch
      %18 = sbr.rel (0) target = $region13
    $region12: #{transformer_base_model.9} parent=1 // pred_region
      _
    $region13: #{transformer_base_model.9} parent=1 // pred_fallthru
      _
    // Predicated region
    $region14: #{transformer_base_model.9} parent=1 // pred_check
      _
    $region15: #{transformer_base_model.9} parent=1 // pred_check_branch
      %20 = sbr.rel (0) target = $region17
    $region16: #{transformer_base_model.9} parent=1 // pred_region
      _
    $region17: #{transformer_base_model.9} parent=1 // pred_fallthru
      _
    // Predicated region
    $region18: #{transformer_base_model.9} parent=1 // pred_check
      _
    $region19: #{transformer_base_model.9} parent=1 // pred_check_branch
      %22 = sbr.rel (0) target = $region21
    $region20: #{transformer_base_model.9} parent=1 // pred_region
      _
    $region21: #{transformer_base_model.9} parent=1 // pred_fallthru
      _
    // Predicated region
    $region22: #{transformer_base_model.9} parent=1 // pred_check
      _
    $region23: #{transformer_base_model.9} parent=1 // pred_check_branch
      %24 = sbr.rel (0) target = $region25
    $region24: #{transformer_base_model.9} parent=1 // pred_region
      _
    $region25: #{transformer_base_model.9} parent=1 // pred_fallthru
      _
    // Predicated region
    $region26: #{transformer_base_model.9} parent=1 // pred_check
      _
    $region27: #{transformer_base_model.9} parent=1 // pred_check_branch
      %26 = sbr.rel (0) target = $region29
    $region28: #{transformer_base_model.9} parent=1 // pred_region
      _
    $region29: #{transformer_base_model.9} parent=1 // pred_fallthru
      _
    %v28 = vld [vmem:[%s0] sm:$0xff]
    %v29 = vld [vmem:[%s0 + $0x8] sm:$0xff]
    %v30 = vpack.c.bf16 %v29, %v28
    %v31 = vld [vmem:[%s1] sm:$0xf]
    %v32 = vld [vmem:[%s1 + $0x4] sm:$0xf]
    %v33 = vld [vmem:[%s1 + $0x8] sm:$0xf]
    %v34 = vld [vmem:[%s1 + $0xc] sm:$0xf]
    %v35 = vld [vmem:[%s2] sm:$0x1]
    %v37 = vlaneseq
    %v38 = vshrl.u32 %v37, 7
    %v39 = vsub.s32 0, %v38
    %v40 = vrot.slane %v35, %v39
    %v46 = vunpack.c.l.b16 %v31
    %v47 = vunpack.c.l.b16 %v32
    %v48 = vunpack.c.l.b16 %v33
    %v49 = vunpack.c.l.b16 %v34
    %v50 = vpack.c.b16 %v47, %v46
    %v51 = vpack.c.b16 %v49, %v48
    %vm54 = vcmask 261120
    %v56 = vsel %vm54, %v30, 0
    %58 = vmatprep.subr.bf16.mxu0 0
    %59 = vmatpush1.bf16.msra.mxu0 %v50
    %60 = vmatprep.subr.bf16.mxu0 0
    %61 = vmatpush1.bf16.msra.mxu0 %v51
    %62 = vmatprep.subr.bf16.mxu0 0
    %63 = vmatpush1.bf16.msra.mxu0 0
    %64 = vmatprep.subr.bf16.mxu0 0
    %65 = vmatpush1.bf16.msra.mxu0 0
    %66 = vmatprep.subr.bf16.mxu0 0
    %67 = vmatpush1.bf16.msra.mxu0 0
    %68 = vmatprep.subr.bf16.mxu0 0
    %69 = vmatpush1.bf16.msra.mxu0 0
    %70 = vmatprep.subr.bf16.mxu0 0
    %71 = vmatpush1.bf16.msra.mxu0 0
    %72 = vmatprep.subr.bf16.mxu0 0
    %73 = vmatpush1.bf16.msra.mxu0 0
    %74 = vmatprep.subr.bf16.mxu0 0
    %75 = vmatpush1.bf16.msra.mxu0 0
    %76 = vmatprep.subr.bf16.mxu0 0
    %77 = vmatpush1.bf16.msra.mxu0 0
    %78 = vmatprep.subr.bf16.mxu0 0
    %79 = vmatpush1.bf16.msra.mxu0 0
    %80 = vmatprep.subr.bf16.mxu0 0
    %81 = vmatpush1.bf16.msra.mxu0 0
    %82 = vmatprep.subr.bf16.mxu0 0
    %83 = vmatpush1.bf16.msra.mxu0 0
    %84 = vmatprep.subr.bf16.mxu0 0
    %85 = vmatpush1.bf16.msra.mxu0 0
    %86 = vmatprep.subr.bf16.mxu0 0
    %87 = vmatpush1.bf16.msra.mxu0 0
    %88 = vmatprep.subr.bf16.mxu0 0
    %89 = vmatpush1.bf16.msra.mxu0 0
    %90 = vmatprep.mubr.bf16.mxu0 0
    %91 = vmatmul.mubr.bf16.gmra.mrb[0].mxu0 %v56
    %v92 = vpop.f32.mrb[0].mxu0
    %v93 = vadd.f32 %v40, %v92
    %v94 = vpop.f32.mrb[0].mxu0
    %v95 = vpop.f32.mrb[0].mxu0
    %v96 = vadd.f32 %v40, %v95
    %v97 = vpop.f32.mrb[0].mxu0
    %98 = vdwg.mxu0
    %v99 = vmul.f32 %v93, 0.5
    %v100 = vmul.f32 %v96, 0.5
    %v101 = vmul.f32 %v93, 0.044715
    %v102 = vmul.f32 %v96, 0.044715
    %v103 = vmul.f32 %v101, %v93
    %v104 = vmul.f32 %v102, %v96
    %v105 = vmul.f32 %v103, %v93
    %v106 = vmul.f32 %v104, %v96
    %v107 = vadd.f32 %v93, %v105
    %v108 = vadd.f32 %v96, %v106
    %v109 = vmul.f32 %v107, 0.7978846
    %v110 = vmul.f32 %v108, 0.7978846
    %v111 = vtanh.pop %v109
    %v112 = vtanh.pop %v110
    %v113 = vadd.f32 %v111, 1.0
    %v114 = vadd.f32 %v112, 1.0
    %v115 = vmul.f32 %v99, %v113
    %v116 = vmul.f32 %v100, %v114
    %v117 = vpack.c.bf16 %v116, %v115
    %v118 = vld [vmem:[%s3] sm:$0xf]
    %v119 = vld [vmem:[%s3 + $0x4] sm:$0xf]
    %v120 = vld [vmem:[%s3 + $0x8] sm:$0xf]
    %v121 = vld [vmem:[%s3 + $0xc] sm:$0xf]
    %v122 = vld [vmem:[%s3 + $0x10] sm:$0xf]
    %v123 = vld [vmem:[%s3 + $0x14] sm:$0xf]
    %v124 = vld [vmem:[%s3 + $0x18] sm:$0xf]
    %v125 = vld [vmem:[%s3 + $0x1c] sm:$0xf]
    %v126 = vld [vmem:[%s4] sm:$0x1]
    %v128 = vlaneseq
    %v129 = vshrl.u32 %v128, 7
    %v130 = vsub.s32 0, %v129
    %v131 = vrot.slane %v126, %v130
    %v141 = vunpack.c.l.b16 %v118
    %v142 = vunpack.c.l.b16 %v119
    %v143 = vunpack.c.l.b16 %v120
    %v144 = vunpack.c.l.b16 %v121
    %v145 = vunpack.c.l.b16 %v122
    %v146 = vunpack.c.l.b16 %v123
    %v147 = vunpack.c.l.b16 %v124
    %v148 = vunpack.c.l.b16 %v125
    %v149 = vpack.c.b16 %v142, %v141
    %v150 = vpack.c.b16 %v144, %v143
    %v151 = vpack.c.b16 %v146, %v145
    %v152 = vpack.c.b16 %v148, %v147
    %vm157 = vcmask 523264
    %v159 = vsel %vm157, %v117, 0
    %161 = vmatprep.subr.bf16.mxu0 0
    %162 = vmatpush1.bf16.msra.mxu0 %v149
    %163 = vmatprep.subr.bf16.mxu0 0
    %164 = vmatpush1.bf16.msra.mxu0 %v150
    %165 = vmatprep.subr.bf16.mxu0 0
    %166 = vmatpush1.bf16.msra.mxu0 %v151
    %167 = vmatprep.subr.bf16.mxu0 0
    %168 = vmatpush1.bf16.msra.mxu0 %v152
    %169 = vmatprep.subr.bf16.mxu0 0
    %170 = vmatpush1.bf16.msra.mxu0 0
    %171 = vmatprep.subr.bf16.mxu0 0
    %172 = vmatpush1.bf16.msra.mxu0 0
    %173 = vmatprep.subr.bf16.mxu0 0
    %174 = vmatpush1.bf16.msra.mxu0 0
    %175 = vmatprep.subr.bf16.mxu0 0
    %176 = vmatpush1.bf16.msra.mxu0 0
    %177 = vmatprep.subr.bf16.mxu0 0
    %178 = vmatpush1.bf16.msra.mxu0 0
    %179 = vmatprep.subr.bf16.mxu0 0
    %180 = vmatpush1.bf16.msra.mxu0 0
    %181 = vmatprep.subr.bf16.mxu0 0
    %182 = vmatpush1.bf16.msra.mxu0 0
    %183 = vmatprep.subr.bf16.mxu0 0
    %184 = vmatpush1.bf16.msra.mxu0 0
    %185 = vmatprep.subr.bf16.mxu0 0
    %186 = vmatpush1.bf16.msra.mxu0 0
    %187 = vmatprep.subr.bf16.mxu0 0
    %188 = vmatpush1.bf16.msra.mxu0 0
    %189 = vmatprep.subr.bf16.mxu0 0
    %190 = vmatpush1.bf16.msra.mxu0 0
    %191 = vmatprep.subr.bf16.mxu0 0
    %192 = vmatpush1.bf16.msra.mxu0 0
    %193 = vmatprep.mubr.bf16.mxu0 0
    %194 = vmatmul.mubr.bf16.gmra.mrb[0].mxu0 %v159
    %v195 = vpop.f32.mrb[0].mxu0
    %v196 = vadd.f32 %v131, %v195
    %v197 = vpop.f32.mrb[0].mxu0
    %v198 = vpop.f32.mrb[0].mxu0
    %v199 = vadd.f32 %v131, %v198
    %v200 = vpop.f32.mrb[0].mxu0
    %201 = vdwg.mxu0
    %v202 = vadd.f32 %v196, %v28
    %v203 = vadd.f32 %v199, %v29
    %v204 = vld [vmem:[%s5] sm:$0x1]
    %v205 = vld [vmem:[%s6] sm:$0x1]
    %v206 = vsel %vm54, %v202, 0.0
    %207 = vadd.xlane.f32.xlu0 %v206
    %v208 = vpop.xlane.xlu0 %207
    %v209 = vsel %vm54, %v203, 0.0
    %210 = vadd.xlane.f32.xlu0 %v209
    %v211 = vpop.xlane.xlu0 %210
    %v212 = vrcp.pop 32.0
    %v213 = vmul.f32 %v208, %v212
    %v214 = vmul.f32 %v211, %v212
    %v215 = vsub.f32 %v202, %v213
    %v216 = vsub.f32 %v203, %v214
    %v217 = vmul.f32 %v215, %v215
    %v218 = vmul.f32 %v216, %v216
    %v219 = vsel %vm54, %v217, 0.0
    %220 = vadd.xlane.f32.xlu0 %v219
    %v221 = vpop.xlane.xlu0 %220
    %v222 = vsel %vm54, %v218, 0.0
    %223 = vadd.xlane.f32.xlu0 %v222
    %v224 = vpop.xlane.xlu0 %223
    %v225 = vmul.f32 %v221, %v212
    %v226 = vmul.f32 %v224, %v212
    %v227 = vadd.f32 %v225, 1e-12
    %v228 = vadd.f32 %v226, 1e-12
    %v229 = vrsqrt.pop %v227
    %v230 = vrsqrt.pop %v228
    %v231 = vmul.f32 %v215, %v229
    %v232 = vmul.f32 %v216, %v230
    %v234 = vlaneseq
    %v235 = vshrl.u32 %v234, 7
    %v236 = vsub.s32 0, %v235
    %v237 = vrot.slane %v204, %v236
    %v239 = vmul.f32 %v231, %v237
    %v240 = vmul.f32 %v232, %v237
    %v242 = vlaneseq
    %v243 = vshrl.u32 %v242, 7
    %v244 = vsub.s32 0, %v243
    %v245 = vrot.slane %v205, %v244
    %v247 = vadd.f32 %v239, %v245
    %v248 = vadd.f32 %v240, %v245
    %249 = vst.msk [vmem:[#allocation3] sm:$0xff] %vm54, %v247
    %250 = vst.msk [vmem:[#allocation3 + $0x8] sm:$0xff] %vm54, %v248
    // Predicated region
    $region30: #{transformer_base_model.9} parent=1 // pred_check
      _
    $region31: #{transformer_base_model.9} parent=1 // pred_check_branch
      %252 = sbr.rel (0) target = $region33
    $region32: #{transformer_base_model.9} parent=1 // pred_region
      %s254 = ssub.s32 256, 256
      %255 = vsyncadd [#allocation4], %s254
      %s256 = sshll.u32 [#allocation3], 4
      %s257 = int_to_ptr.vmem [resolvable:$true] %s256
      %262 = dma.vmem_to_hbm [thread:$0]  %s257, 256, %s7, [#allocation4], 128, 128, 8
    $region33: #{transformer_base_model.9} parent=1 // pred_fallthru
      _
    // Predicated region
    $region34: #{transformer_base_model.9} parent=1 // pred_check
      _
    $region35: #{transformer_base_model.9} parent=1 // pred_check_branch
      %264 = sbr.rel (0) target = $region37
    $region36: #{transformer_base_model.9} parent=1 // pred_region
      %265 = dma.done [#allocation4], 256
    $region37: #{transformer_base_model.9} parent=1 // pred_fallthru
      _
    %266 = vsyncpa [#allocation4], 1

// kernel: transformer_base_model.6
$region0: #{transformer_base_model.6}
  #allocation0 [shape = 'u32[]', space=smem, size = 0x4, offset = 0x4, fixed_abs, tag = 'smem constant byte address 0x4 - core index']
  #allocation1 [shape = 'u32[144,128]{1,0:T(1,128)}', space=vmem, size = 0x12000, scoped, tag = 'internal scratch']
  #allocation2 [shape = 'f32[8,32]{1,0:T(8,128)}', space=vmem, size = 0x1000, scoped, tag = 'scratch operand']
  %s0 = inlined_call_operand.vmem [shape: f32[2,8,32], index: 0, kind: input, shape index: {}]
  %s1 = inlined_call_operand.vmem [shape: f32[2,1,8], index: 1, kind: input, shape index: {}]
  %s2 = inlined_call_operand.vmem [shape: bf16[4,32,24], index: 2, kind: input, shape index: {}]
  %s3 = inlined_call_operand.vmem [shape: f32[4,1,24], index: 3, kind: input, shape index: {}]
  %s4 = inlined_call_operand.vmem [shape: bf16[4,8,32], index: 4, kind: input, shape index: {}]
  %s5 = inlined_call_operand.vmem [shape: f32[1,32], index: 5, kind: input, shape index: {}]
  %s6 = inlined_call_operand.vmem [shape: f32[1,32], index: 6, kind: input, shape index: {}]
  %s7 = inlined_call_operand.vmem [shape: f32[1,32], index: 7, kind: input, shape index: {}]
  %s8 = inlined_call_operand.vmem [shape: f32[2,8,32], index: 8, kind: output, shape index: {}]
  %s9 = sld [smem:[#allocation0]]
  $region73: #{transformer_base_model.6} parent=0
    _
  %s11 = ssub.s32 1, %s9
  %s12 = scalar_select 0, %s11, %s9
  loop: start=0, step=1, limit=10
  $region2: #{transformer_base_model.6} parent=0 // loop_pre_header
    _
  $region3: #{transformer_base_model.6} parent=0 // loop_header
    %s14 = sphi 0, %s18
    %p15 = scmp.ge.s32.totalorder %s14, 10
    %s21 = sphi 0, %s33
    %s22 = sphi 0, %s29
    %s23 = sphi 0, %s21
    %s24 = sphi 0, %s22
    %s25 = sphi 0, %s23
    %s26 = sphi 0, %s24
    %s36 = sphi 0, %s38
    %s39 = sphi 0, %s36
    %s40 = sphi 0, %s39
    %s56 = sphi 0, %s40
    %s62 = sphi 0, %s64
    %s65 = sphi 0, %s62
    %s66 = sphi 0, %s65
    %s82 = sphi 0, %s66
    %s88 = sphi 0, %s90
    %s91 = sphi 0, %s88
    %s92 = sphi 0, %s91
    %s108 = sphi 0, %s92
    %s114 = sphi 0, %s116
    %s117 = sphi 0, %s114
    %s118 = sphi 0, %s117
    %s134 = sphi 0, %s118
    %s140 = sphi 0, %s142
    %s143 = sphi 0, %s140
    %s144 = sphi 0, %s143
    %s160 = sphi 0, %s144
    %s164 = sphi 0, %s164
    %s166 = sphi 0, %s164
    %s167 = sphi 0, %s166
    %s181 = sphi 0, %s167
    %s185 = sphi 0, %s185
    %s187 = sphi 0, %s185
    %s188 = sphi 0, %s187
    %s202 = sphi 0, %s188
    %s206 = sphi 0, %s206
    %s208 = sphi 0, %s206
    %s209 = sphi 0, %s208
    %s223 = sphi 0, %s209
    %s229 = sphi 0, %s231
    %s232 = sphi 0, %s229
    %s233 = sphi 0, %s232
    %s249 = sphi 0, %s233
  $region4: #{transformer_base_model.6} parent=0 // loop_header_branch
    %17 = sbr.rel (%p15) target = $region8
  $region5: #{transformer_base_model.6} parent=0 // loop_body
    %s19 = ssub.s32 %s14, 1
    %s20 = ssub.s32 %s14, 2
    %s27 = sadd.s32 1, %s22
    %p28 = scmp.ge.s32.totalorder %s27, 4
    %s29 = scalar_select %p28, 0, %s27
    %s30 = sadd.s32 1, %s21
    %s31 = scalar_select %p28, %s30, %s21
    %p32 = scmp.ge.s32.totalorder %s31, 2
    %s33 = scalar_select %p32, 0, %s31
    %s34 = ssub.s32 %s21, %s33
    %p35 = scmp.eq.s32.totalorder %s34, 0
    %s37 = sadd.s32 %s36, 1
    %s38 = scalar_select %p35, %s36, %s37
    %p41 = pneg %p35
    %p42 = scmp.eq.s32.totalorder %s14, 7
    %p43 = por %p41, %p42
    %p44 = scmp.ne.s32.totalorder %s36, %s39
    %p45 = scmp.eq.s32.totalorder %s14, 0
    %p46 = por %p44, %p45
    %p47 = scmp.ne.s32.totalorder %s36, %s39
    %p48 = scmp.eq.s32.totalorder %s19, 7
    %p49 = por %p47, %p48
    %p50 = scmp.ne.s32.totalorder %s39, %s40
    %p51 = scmp.eq.s32.totalorder %s19, 0
    %p52 = por %p50, %p51
    %p53 = scmp.ne.s32.totalorder %s39, %s40
    %p54 = scmp.eq.s32.totalorder %s20, 7
    %p55 = por %p53, %p54
    %p57 = scmp.ne.s32.totalorder %s40, %s56
    %p58 = scmp.eq.s32.totalorder %s20, 0
    %p59 = por %p57, %p58
    %s60 = ssub.s32 %s21, %s33
    %p61 = scmp.eq.s32.totalorder %s60, 0
    %s63 = sadd.s32 %s62, 1
    %s64 = scalar_select %p61, %s62, %s63
    %p67 = pneg %p61
    %p68 = scmp.eq.s32.totalorder %s14, 7
    %p69 = por %p67, %p68
    %p70 = scmp.ne.s32.totalorder %s62, %s65
    %p71 = scmp.eq.s32.totalorder %s14, 0
    %p72 = por %p70, %p71
    %p73 = scmp.ne.s32.totalorder %s62, %s65
    %p74 = scmp.eq.s32.totalorder %s19, 7
    %p75 = por %p73, %p74
    %p76 = scmp.ne.s32.totalorder %s65, %s66
    %p77 = scmp.eq.s32.totalorder %s19, 0
    %p78 = por %p76, %p77
    %p79 = scmp.ne.s32.totalorder %s65, %s66
    %p80 = scmp.eq.s32.totalorder %s20, 7
    %p81 = por %p79, %p80
    %p83 = scmp.ne.s32.totalorder %s66, %s82
    %p84 = scmp.eq.s32.totalorder %s20, 0
    %p85 = por %p83, %p84
    %s86 = ssub.s32 %s22, %s29
    %p87 = scmp.eq.s32.totalorder %s86, 0
    %s89 = sadd.s32 %s88, 1
    %s90 = scalar_select %p87, %s88, %s89
    %p93 = pneg %p87
    %p94 = scmp.eq.s32.totalorder %s14, 7
    %p95 = por %p93, %p94
    %p96 = scmp.ne.s32.totalorder %s88, %s91
    %p97 = scmp.eq.s32.totalorder %s14, 0
    %p98 = por %p96, %p97
    %p99 = scmp.ne.s32.totalorder %s88, %s91
    %p100 = scmp.eq.s32.totalorder %s19, 7
    %p101 = por %p99, %p100
    %p102 = scmp.ne.s32.totalorder %s91, %s92
    %p103 = scmp.eq.s32.totalorder %s19, 0
    %p104 = por %p102, %p103
    %p105 = scmp.ne.s32.totalorder %s91, %s92
    %p106 = scmp.eq.s32.totalorder %s20, 7
    %p107 = por %p105, %p106
    %p109 = scmp.ne.s32.totalorder %s92, %s108
    %p110 = scmp.eq.s32.totalorder %s20, 0
    %p111 = por %p109, %p110
    %s112 = ssub.s32 %s22, %s29
    %p113 = scmp.eq.s32.totalorder %s112, 0
    %s115 = sadd.s32 %s114, 1
    %s116 = scalar_select %p113, %s114, %s115
    %p119 = pneg %p113
    %p120 = scmp.eq.s32.totalorder %s14, 7
    %p121 = por %p119, %p120
    %p122 = scmp.ne.s32.totalorder %s114, %s117
    %p123 = scmp.eq.s32.totalorder %s14, 0
    %p124 = por %p122, %p123
    %p125 = scmp.ne.s32.totalorder %s114, %s117
    %p126 = scmp.eq.s32.totalorder %s19, 7
    %p127 = por %p125, %p126
    %p128 = scmp.ne.s32.totalorder %s117, %s118
    %p129 = scmp.eq.s32.totalorder %s19, 0
    %p130 = por %p128, %p129
    %p131 = scmp.ne.s32.totalorder %s117, %s118
    %p132 = scmp.eq.s32.totalorder %s20, 7
    %p133 = por %p131, %p132
    %p135 = scmp.ne.s32.totalorder %s118, %s134
    %p136 = scmp.eq.s32.totalorder %s20, 0
    %p137 = por %p135, %p136
    %s138 = ssub.s32 %s22, %s29
    %p139 = scmp.eq.s32.totalorder %s138, 0
    %s141 = sadd.s32 %s140, 1
    %s142 = scalar_select %p139, %s140, %s141
    %p145 = pneg %p139
    %p146 = scmp.eq.s32.totalorder %s14, 7
    %p147 = por %p145, %p146
    %p148 = scmp.ne.s32.totalorder %s140, %s143
    %p149 = scmp.eq.s32.totalorder %s14, 0
    %p150 = por %p148, %p149
    %p151 = scmp.ne.s32.totalorder %s140, %s143
    %p152 = scmp.eq.s32.totalorder %s19, 7
    %p153 = por %p151, %p152
    %p154 = scmp.ne.s32.totalorder %s143, %s144
    %p155 = scmp.eq.s32.totalorder %s19, 0
    %p156 = por %p154, %p155
    %p157 = scmp.ne.s32.totalorder %s143, %s144
    %p158 = scmp.eq.s32.totalorder %s20, 7
    %p159 = por %p157, %p158
    %p161 = scmp.ne.s32.totalorder %s144, %s160
    %p162 = scmp.eq.s32.totalorder %s20, 0
    %p163 = por %p161, %p162
    %s165 = sadd.s32 %s164, 1
    %p168 = scmp.eq.s32.totalorder %s14, 7
    %p169 = scmp.ne.s32.totalorder %s164, %s166
    %p170 = scmp.eq.s32.totalorder %s14, 0
    %p171 = por %p169, %p170
    %p172 = scmp.ne.s32.totalorder %s164, %s166
    %p173 = scmp.eq.s32.totalorder %s19, 7
    %p174 = por %p172, %p173
    %p175 = scmp.ne.s32.totalorder %s166, %s167
    %p176 = scmp.eq.s32.totalorder %s19, 0
    %p177 = por %p175, %p176
    %p178 = scmp.ne.s32.totalorder %s166, %s167
    %p179 = scmp.eq.s32.totalorder %s20, 7
    %p180 = por %p178, %p179
    %p182 = scmp.ne.s32.totalorder %s167, %s181
    %p183 = scmp.eq.s32.totalorder %s20, 0
    %p184 = por %p182, %p183
    %s186 = sadd.s32 %s185, 1
    %p189 = scmp.eq.s32.totalorder %s14, 7
    %p190 = scmp.ne.s32.totalorder %s185, %s187
    %p191 = scmp.eq.s32.totalorder %s14, 0
    %p192 = por %p190, %p191
    %p193 = scmp.ne.s32.totalorder %s185, %s187
    %p194 = scmp.eq.s32.totalorder %s19, 7
    %p195 = por %p193, %p194
    %p196 = scmp.ne.s32.totalorder %s187, %s188
    %p197 = scmp.eq.s32.totalorder %s19, 0
    %p198 = por %p196, %p197
    %p199 = scmp.ne.s32.totalorder %s187, %s188
    %p200 = scmp.eq.s32.totalorder %s20, 7
    %p201 = por %p199, %p200
    %p203 = scmp.ne.s32.totalorder %s188, %s202
    %p204 = scmp.eq.s32.totalorder %s20, 0
    %p205 = por %p203, %p204
    %s207 = sadd.s32 %s206, 1
    %p210 = scmp.eq.s32.totalorder %s14, 7
    %p211 = scmp.ne.s32.totalorder %s206, %s208
    %p212 = scmp.eq.s32.totalorder %s14, 0
    %p213 = por %p211, %p212
    %p214 = scmp.ne.s32.totalorder %s206, %s208
    %p215 = scmp.eq.s32.totalorder %s19, 7
    %p216 = por %p214, %p215
    %p217 = scmp.ne.s32.totalorder %s208, %s209
    %p218 = scmp.eq.s32.totalorder %s19, 0
    %p219 = por %p217, %p218
    %p220 = scmp.ne.s32.totalorder %s208, %s209
    %p221 = scmp.eq.s32.totalorder %s20, 7
    %p222 = por %p220, %p221
    %p224 = scmp.ne.s32.totalorder %s209, %s223
    %p225 = scmp.eq.s32.totalorder %s20, 0
    %p226 = por %p224, %p225
    %s227 = ssub.s32 %s21, %s33
    %p228 = scmp.eq.s32.totalorder %s227, 0
    %s230 = sadd.s32 %s229, 1
    %s231 = scalar_select %p228, %s229, %s230
    %p234 = pneg %p228
    %p235 = scmp.eq.s32.totalorder %s14, 7
    %p236 = por %p234, %p235
    %p237 = scmp.ne.s32.totalorder %s229, %s232
    %p238 = scmp.eq.s32.totalorder %s14, 0
    %p239 = por %p237, %p238
    %p240 = scmp.ne.s32.totalorder %s229, %s232
    %p241 = scmp.eq.s32.totalorder %s19, 7
    %p242 = por %p240, %p241
    %p243 = scmp.ne.s32.totalorder %s232, %s233
    %p244 = scmp.eq.s32.totalorder %s19, 0
    %p245 = por %p243, %p244
    %p246 = scmp.ne.s32.totalorder %s232, %s233
    %p247 = scmp.eq.s32.totalorder %s20, 7
    %p248 = por %p246, %p247
    %p250 = scmp.ne.s32.totalorder %s233, %s249
    %p251 = scmp.eq.s32.totalorder %s20, 0
    %p252 = por %p250, %p251
    %p253 = scmp.le.s32.totalorder 1, %s14
    %p254 = scmp.lt.s32.totalorder %s14, 9
    %p255 = pnand %p253, %p254
    %p256 = pneg %p255
    // Predicated region
    $region9: #{transformer_base_model.6} parent=5 // pred_check
      _
    $region10: #{transformer_base_model.6} parent=5 // pred_check_branch
      %258 = sbr.rel (%p255) target = $region12
    $region11: #{transformer_base_model.6} parent=5 // pred_region
      %s259 = ssub.s32 %s14, 1
      // Predicated region
      $region13: #{transformer_base_model.6} parent=11 // pred_check
        %p260 = pneg %p177
      $region14: #{transformer_base_model.6} parent=11 // pred_check_branch
        %262 = sbr.rel (%p260) target = $region16
      $region15: #{transformer_base_model.6} parent=11 // pred_region
        _
      $region16: #{transformer_base_model.6} parent=11 // pred_fallthru
        _
      // Predicated region
      $region17: #{transformer_base_model.6} parent=11 // pred_check
        %p263 = pneg %p198
      $region18: #{transformer_base_model.6} parent=11 // pred_check_branch
        %265 = sbr.rel (%p263) target = $region20
      $region19: #{transformer_base_model.6} parent=11 // pred_region
        _
      $region20: #{transformer_base_model.6} parent=11 // pred_fallthru
        _
      // Predicated region
      $region21: #{transformer_base_model.6} parent=11 // pred_check
        %p266 = pneg %p219
      $region22: #{transformer_base_model.6} parent=11 // pred_check_branch
        %268 = sbr.rel (%p266) target = $region24
      $region23: #{transformer_base_model.6} parent=11 // pred_region
        _
      $region24: #{transformer_base_model.6} parent=11 // pred_fallthru
        _
    $region12: #{transformer_base_model.6} parent=5 // pred_fallthru
      _
    %p269 = scmp.lt.s32.totalorder %s14, 8
    // Predicated region
    $region25: #{transformer_base_model.6} parent=5 // pred_check
      %p270 = pneg %p269
    $region26: #{transformer_base_model.6} parent=5 // pred_check_branch
      %272 = sbr.rel (%p270) target = $region28
    $region27: #{transformer_base_model.6} parent=5 // pred_region
      // Predicated region
      $region29: #{transformer_base_model.6} parent=27 // pred_check
        %p273 = pneg %p46
      $region30: #{transformer_base_model.6} parent=27 // pred_check_branch
        %275 = sbr.rel (%p273) target = $region32
      $region31: #{transformer_base_model.6} parent=27 // pred_region
        %p276 = scmp.lt.s32.totalorder %s21, 1
        %s277 = scalar_select %p276, %s21, 1
        %s278 = smul.addr %s277, 8
        %s279 = scalar_lea.vmem %s0, %s278
      $region32: #{transformer_base_model.6} parent=27 // pred_fallthru
        _
      // Predicated region
      $region33: #{transformer_base_model.6} parent=27 // pred_check
        %p280 = pneg %p72
      $region34: #{transformer_base_model.6} parent=27 // pred_check_branch
        %282 = sbr.rel (%p280) target = $region36
      $region35: #{transformer_base_model.6} parent=27 // pred_region
        %p283 = scmp.lt.s32.totalorder %s21, 1
        %s284 = scalar_select %p283, %s21, 1
        %s285 = scalar_lea.vmem %s1, %s284
      $region36: #{transformer_base_model.6} parent=27 // pred_fallthru
        _
      // Predicated region
      $region37: #{transformer_base_model.6} parent=27 // pred_check
        %p286 = pneg %p98
      $region38: #{transformer_base_model.6} parent=27 // pred_check_branch
        %288 = sbr.rel (%p286) target = $region40
      $region39: #{transformer_base_model.6} parent=27 // pred_region
        %p289 = scmp.lt.s32.totalorder %s22, 3
        %s290 = scalar_select %p289, %s22, 3
        %s291 = smul.addr %s290, 4
        %s292 = smul.addr %s291, 4
        %s293 = scalar_lea.vmem %s2, %s292
      $region40: #{transformer_base_model.6} parent=27 // pred_fallthru
        _
      // Predicated region
      $region41: #{transformer_base_model.6} parent=27 // pred_check
        %p294 = pneg %p124
      $region42: #{transformer_base_model.6} parent=27 // pred_check_branch
        %296 = sbr.rel (%p294) target = $region44
      $region43: #{transformer_base_model.6} parent=27 // pred_region
        %p297 = scmp.lt.s32.totalorder %s22, 3
        %s298 = scalar_select %p297, %s22, 3
        %s299 = scalar_lea.vmem %s3, %s298
      $region44: #{transformer_base_model.6} parent=27 // pred_fallthru
        _
      // Predicated region
      $region45: #{transformer_base_model.6} parent=27 // pred_check
        %p300 = pneg %p150
      $region46: #{transformer_base_model.6} parent=27 // pred_check_branch
        %302 = sbr.rel (%p300) target = $region48
      $region47: #{transformer_base_model.6} parent=27 // pred_region
        %p303 = scmp.lt.s32.totalorder %s22, 3
        %s304 = scalar_select %p303, %s22, 3
        %s305 = smul.addr %s304, 4
        %s306 = scalar_lea.vmem %s4, %s305
      $region48: #{transformer_base_model.6} parent=27 // pred_fallthru
        _
    $region28: #{transformer_base_model.6} parent=5 // pred_fallthru
      _
    %p307 = scmp.le.s32.totalorder 1, %s14
    %p308 = scmp.lt.s32.totalorder %s14, 9
    %p309 = pnand %p307, %p308
    %p310 = pneg %p309
    // Predicated region
    $region49: #{transformer_base_model.6} parent=5 // pred_check
      _
    $region50: #{transformer_base_model.6} parent=5 // pred_check_branch
      %312 = sbr.rel (%p309) target = $region52
    $region51: #{transformer_base_model.6} parent=5 // pred_region
      %s313 = ssub.s32 %s14, 1
      %p314 = scmp.lt.s32.totalorder %s23, 1
      %s315 = scalar_select %p314, %s23, 1
      %s316 = smul.addr %s315, 8
      %s317 = scalar_lea.vmem %s0, %s316
      %p318 = pneg %p52
      %p319 = pneg %p49
      %p320 = scmp.lt.s32.totalorder %s23, 1
      %s321 = scalar_select %p320, %s23, 1
      %s322 = scalar_lea.vmem %s1, %s321
      %p323 = pneg %p78
      %p324 = pneg %p75
      %p325 = scmp.lt.s32.totalorder %s24, 3
      %s326 = scalar_select %p325, %s24, 3
      %s327 = smul.addr %s326, 4
      %s328 = smul.addr %s327, 4
      %s329 = scalar_lea.vmem %s2, %s328
      %p330 = pneg %p104
      %p331 = pneg %p101
      %p332 = scmp.lt.s32.totalorder %s24, 3
      %s333 = scalar_select %p332, %s24, 3
      %s334 = scalar_lea.vmem %s3, %s333
      %p335 = pneg %p130
      %p336 = pneg %p127
      %p337 = scmp.lt.s32.totalorder %s24, 3
      %s338 = scalar_select %p337, %s24, 3
      %s339 = smul.addr %s338, 4
      %s340 = scalar_lea.vmem %s4, %s339
      %p341 = pneg %p156
      %p342 = pneg %p153
      %p343 = pneg %p177
      %p344 = pneg %p174
      %p345 = pneg %p198
      %p346 = pneg %p195
      %p347 = pneg %p219
      %p348 = pneg %p216
      %p349 = pneg %p245
      %p350 = pneg %p242
      %p351 = scmp.lt.s32.totalorder %s23, 1
      %s352 = scalar_select %p351, %s23, 1
      %s353 = smul.addr %s352, 8
      %s354 = scalar_lea.vmem %s8, %s353
      %p355 = scmp.lt.s32.totalorder %s23, 1
      %s356 = scalar_select %p355, %s23, 1
      %s357 = smul.addr %s356, 8
      %s358 = scalar_lea.vmem %s0, %s357
      %p359 = scmp.lt.s32.totalorder %s23, 1
      %s360 = scalar_select %p359, %s23, 1
      %s361 = scalar_lea.vmem %s1, %s360
      %p362 = scmp.lt.s32.totalorder %s24, 3
      %s363 = scalar_select %p362, %s24, 3
      %s364 = smul.addr %s363, 4
      %s365 = smul.addr %s364, 4
      %s366 = scalar_lea.vmem %s2, %s365
      %p367 = scmp.lt.s32.totalorder %s24, 3
      %s368 = scalar_select %p367, %s24, 3
      %s369 = scalar_lea.vmem %s3, %s368
      %p370 = scmp.lt.s32.totalorder %s24, 3
      %s371 = scalar_select %p370, %s24, 3
      %s372 = smul.addr %s371, 4
      %s373 = scalar_lea.vmem %s4, %s372
      %p374 = scmp.lt.s32.totalorder %s23, 1
      %s375 = scalar_select %p374, %s23, 1
      %s376 = smul.addr %s375, 8
      %s377 = scalar_lea.vmem %s8, %s376
      %v379 = vld [vmem:[%s358] sm:$0xff]
      %v380 = vpack.c.bf16 %v379, %v379
      %p381 = scmp.eq.s32.totalorder %s24, 0
      // Predicated region
      $region53: #{transformer_base_model.6} parent=51 // pred_check
        %p382 = pneg %p381
      $region54: #{transformer_base_model.6} parent=51 // pred_check_branch
        %384 = sbr.rel (%p382) target = $region56
      $region55: #{transformer_base_model.6} parent=51 // pred_region
        %vm385 = vcmask 261120
        %386 = vst.msk [vmem:[#allocation2] sm:$0xff] %vm385, 0.0
      $region56: #{transformer_base_model.6} parent=51 // pred_fallthru
        _
      %v387 = vld [vmem:[%s366] sm:$0xf]
      %v388 = vld [vmem:[%s366 + $0x4] sm:$0xf]
      %v389 = vld [vmem:[%s366 + $0x8] sm:$0xf]
      %v390 = vld [vmem:[%s366 + $0xc] sm:$0xf]
      %v391 = vld [vmem:[%s369] sm:$0x1]
      %v393 = vlaneseq
      %v394 = vshrl.u32 %v393, 7
      %v395 = vsub.s32 0, %v394
      %v396 = vrot.slane %v391, %v395
      %v402 = vunpack.c.l.b16 %v387
      %v403 = vunpack.c.l.b16 %v388
      %v404 = vunpack.c.l.b16 %v389
      %v405 = vunpack.c.l.b16 %v390
      %v406 = vpack.c.b16 %v403, %v402
      %v407 = vpack.c.b16 %v405, %v404
      %vm410 = vcmask 261120
      %v412 = vsel %vm410, %v380, 0
      %414 = vmatprep.subr.bf16.mxu0 0
      %415 = vmatpush1.bf16.msra.mxu0 %v406
      %416 = vmatprep.subr.bf16.mxu0 0
      %417 = vmatpush1.bf16.msra.mxu0 %v407
      %418 = vmatprep.subr.bf16.mxu0 0
      %419 = vmatpush1.bf16.msra.mxu0 0
      %420 = vmatprep.subr.bf16.mxu0 0
      %421 = vmatpush1.bf16.msra.mxu0 0
      %422 = vmatprep.subr.bf16.mxu0 0
      %423 = vmatpush1.bf16.msra.mxu0 0
      %424 = vmatprep.subr.bf16.mxu0 0
      %425 = vmatpush1.bf16.msra.mxu0 0
      %426 = vmatprep.subr.bf16.mxu0 0
      %427 = vmatpush1.bf16.msra.mxu0 0
      %428 = vmatprep.subr.bf16.mxu0 0
      %429 = vmatpush1.bf16.msra.mxu0 0
      %430 = vmatprep.subr.bf16.mxu0 0
      %431 = vmatpush1.bf16.msra.mxu0 0
      %432 = vmatprep.subr.bf16.mxu0 0
      %433 = vmatpush1.bf16.msra.mxu0 0
      %434 = vmatprep.subr.bf16.mxu0 0
      %435 = vmatpush1.bf16.msra.mxu0 0
      %436 = vmatprep.subr.bf16.mxu0 0
      %437 = vmatpush1.bf16.msra.mxu0 0
      %438 = vmatprep.subr.bf16.mxu0 0
      %439 = vmatpush1.bf16.msra.mxu0 0
      %440 = vmatprep.subr.bf16.mxu0 0
      %441 = vmatpush1.bf16.msra.mxu0 0
      %442 = vmatprep.subr.bf16.mxu0 0
      %443 = vmatpush1.bf16.msra.mxu0 0
      %444 = vmatprep.subr.bf16.mxu0 0
      %445 = vmatpush1.bf16.msra.mxu0 0
      %446 = vmatprep.mubr.bf16.mxu0 0
      %447 = vmatmul.mubr.bf16.gmra.mrb[0].mxu0 %v412
      %v448 = vpop.f32.mrb[0].mxu0
      %v449 = vadd.f32 %v396, %v448
      %v450 = vpop.f32.mrb[0].mxu0
      %v451 = vpop.f32.mrb[0].mxu0
      %v452 = vpop.f32.mrb[0].mxu0
      %453 = vdwg.mxu0
      %v454 = vpack.c.bf16 %v449, %v449
      %v455 = vld [vmem:[%s361] sm:$0x1]
      %v457 = vlaneseq
      %v458 = vshrl.u32 %v457, 7
      %v459 = vsub.s32 0, %v458
      %v460 = vrot.slane %v455, %v459
      %463 = vrot.lane.b32.xlu0 %v454, 120
      %v464 = vpop.permute.xlu0 %463
      %vm465 = vcmask 64512
      %v467 = vsel %vm465, %v454, 0
      %v470 = vsel %vm465, %v464, 0
      %472 = vmatprep.subr.bf16.mxu0 0
      %473 = vmatpush1.bf16.xpose.msra.mxu0 %v470
      %474 = vmatprep.subr.bf16.mxu0 0
      %475 = vmatpush1.bf16.xpose.msra.mxu0 0
      %476 = vmatprep.subr.bf16.mxu0 0
      %477 = vmatpush1.bf16.xpose.msra.mxu0 0
      %478 = vmatprep.subr.bf16.mxu0 0
      %479 = vmatpush1.bf16.xpose.msra.mxu0 0
      %480 = vmatprep.subr.bf16.mxu0 0
      %481 = vmatpush1.bf16.xpose.msra.mxu0 0
      %482 = vmatprep.subr.bf16.mxu0 0
      %483 = vmatpush1.bf16.xpose.msra.mxu0 0
      %484 = vmatprep.subr.bf16.mxu0 0
      %485 = vmatpush1.bf16.xpose.msra.mxu0 0
      %486 = vmatprep.subr.bf16.mxu0 0
      %487 = vmatpush1.bf16.xpose.msra.mxu0 0
      %488 = vmatprep.subr.bf16.mxu0 0
      %489 = vmatpush1.bf16.xpose.msra.mxu0 0
      %490 = vmatprep.subr.bf16.mxu0 0
      %491 = vmatpush1.bf16.xpose.msra.mxu0 0
      %492 = vmatprep.subr.bf16.mxu0 0
      %493 = vmatpush1.bf16.xpose.msra.mxu0 0
      %494 = vmatprep.subr.bf16.mxu0 0
      %495 = vmatpush1.bf16.xpose.msra.mxu0 0
      %496 = vmatprep.subr.bf16.mxu0 0
      %497 = vmatpush1.bf16.xpose.msra.mxu0 0
      %498 = vmatprep.subr.bf16.mxu0 0
      %499 = vmatpush1.bf16.xpose.msra.mxu0 0
      %500 = vmatprep.subr.bf16.mxu0 0
      %501 = vmatpush1.bf16.xpose.msra.mxu0 0
      %502 = vmatprep.subr.bf16.mxu0 0
      %503 = vmatpush1.bf16.xpose.msra.mxu0 0
      %504 = vmatprep.mubr.bf16.mxu0 0
      %505 = vmatmul.mubr.bf16.gmra.mrb[0].mxu0 %v467
      %v506 = vpop.f32.mrb[0].mxu0
      %v507 = vadd.f32 %v460, %v506
      %v508 = vpop.f32.mrb[0].mxu0
      %v509 = vpop.f32.mrb[0].mxu0
      %v510 = vpop.f32.mrb[0].mxu0
      %511 = vdwg.mxu0
      %v512 = vsel %vm465, %v507, -inf
      %513 = vmax.xlane.f32.xlu0 %v512
      %v514 = vpop.xlane.xlu0 %513
      %v515 = vsub.f32 %v507, %v514
      %v516 = vmul.f32 %v515, 1.442695
      %v517 = vpow.pop %v516
      %v518 = vsel %vm465, %v517, 0.0
      %519 = vadd.xlane.f32.xlu0 %v518
      %v520 = vpop.xlane.xlu0 %519
      %v521 = vpack.c.bf16 %v517, %v517
      %522 = vrot.lane.b32.xlu0 %v454, 112
      %v523 = vpop.permute.xlu0 %522
      %v525 = vsel %vm465, %v521, 0
      %vm527 = vcmask 1043456
      %v529 = vsel %vm527, %v523, 0
      %531 = vmatprep.subr.bf16.mxu0 0
      %532 = vmatpush1.bf16.msra.mxu0 %v529
      %533 = vmatprep.subr.bf16.mxu0 0
      %534 = vmatpush1.bf16.msra.mxu0 0
      %535 = vmatprep.subr.bf16.mxu0 0
      %536 = vmatpush1.bf16.msra.mxu0 0
      %537 = vmatprep.subr.bf16.mxu0 0
      %538 = vmatpush1.bf16.msra.mxu0 0
      %539 = vmatprep.subr.bf16.mxu0 0
      %540 = vmatpush1.bf16.msra.mxu0 0
      %541 = vmatprep.subr.bf16.mxu0 0
      %542 = vmatpush1.bf16.msra.mxu0 0
      %543 = vmatprep.subr.bf16.mxu0 0
      %544 = vmatpush1.bf16.msra.mxu0 0
      %545 = vmatprep.subr.bf16.mxu0 0
      %546 = vmatpush1.bf16.msra.mxu0 0
      %547 = vmatprep.subr.bf16.mxu0 0
      %548 = vmatpush1.bf16.msra.mxu0 0
      %549 = vmatprep.subr.bf16.mxu0 0
      %550 = vmatpush1.bf16.msra.mxu0 0
      %551 = vmatprep.subr.bf16.mxu0 0
      %552 = vmatpush1.bf16.msra.mxu0 0
      %553 = vmatprep.subr.bf16.mxu0 0
      %554 = vmatpush1.bf16.msra.mxu0 0
      %555 = vmatprep.subr.bf16.mxu0 0
      %556 = vmatpush1.bf16.msra.mxu0 0
      %557 = vmatprep.subr.bf16.mxu0 0
      %558 = vmatpush1.bf16.msra.mxu0 0
      %559 = vmatprep.subr.bf16.mxu0 0
      %560 = vmatpush1.bf16.msra.mxu0 0
      %561 = vmatprep.subr.bf16.mxu0 0
      %562 = vmatpush1.bf16.msra.mxu0 0
      %563 = vmatprep.mubr.bf16.mxu0 0
      %564 = vmatmul.mubr.bf16.gmra.mrb[0].mxu0 %v525
      %v565 = vpop.f32.mrb[0].mxu0
      %v566 = vadd.f32 0.0, %v565
      %v567 = vpop.f32.mrb[0].mxu0
      %v568 = vpop.f32.mrb[0].mxu0
      %v569 = vpop.f32.mrb[0].mxu0
      %570 = vdwg.mxu0
      %v571 = vrcp.pop %v520
      %v572 = vmul.f32 %v566, %v571
      %v573 = vld [vmem:[#allocation2] sm:$0xff]
      %v574 = vpack.c.bf16 %v572, %v572
      %v575 = vld [vmem:[%s373] sm:$0xf]
      %v577 = vsel %vm465, %v574, 0
      %v580 = vsel %vm527, %v575, 0
      %582 = vmatprep.subr.bf16.mxu0 0
      %583 = vmatpush1.bf16.msra.mxu0 %v580
      %584 = vmatprep.subr.bf16.mxu0 0
      %585 = vmatpush1.bf16.msra.mxu0 0
      %586 = vmatprep.subr.bf16.mxu0 0
      %587 = vmatpush1.bf16.msra.mxu0 0
      %588 = vmatprep.subr.bf16.mxu0 0
      %589 = vmatpush1.bf16.msra.mxu0 0
      %590 = vmatprep.subr.bf16.mxu0 0
      %591 = vmatpush1.bf16.msra.mxu0 0
      %592 = vmatprep.subr.bf16.mxu0 0
      %593 = vmatpush1.bf16.msra.mxu0 0
      %594 = vmatprep.subr.bf16.mxu0 0
      %595 = vmatpush1.bf16.msra.mxu0 0
      %596 = vmatprep.subr.bf16.mxu0 0
      %597 = vmatpush1.bf16.msra.mxu0 0
      %598 = vmatprep.subr.bf16.mxu0 0
      %599 = vmatpush1.bf16.msra.mxu0 0
      %600 = vmatprep.subr.bf16.mxu0 0
      %601 = vmatpush1.bf16.msra.mxu0 0
      %602 = vmatprep.subr.bf16.mxu0 0
      %603 = vmatpush1.bf16.msra.mxu0 0
      %604 = vmatprep.subr.bf16.mxu0 0
      %605 = vmatpush1.bf16.msra.mxu0 0
      %606 = vmatprep.subr.bf16.mxu0 0
      %607 = vmatpush1.bf16.msra.mxu0 0
      %608 = vmatprep.subr.bf16.mxu0 0
      %609 = vmatpush1.bf16.msra.mxu0 0
      %610 = vmatprep.subr.bf16.mxu0 0
      %611 = vmatpush1.bf16.msra.mxu0 0
      %612 = vmatprep.subr.bf16.mxu0 0
      %613 = vmatpush1.bf16.msra.mxu0 0
      %614 = vmatprep.mubr.bf16.mxu0 0
      %615 = vmatmul.mubr.bf16.gmra.mrb[0].mxu0 %v577
      %v616 = vpop.f32.mrb[0].mxu0
      %v617 = vadd.f32 0.0, %v616
      %v618 = vpop.f32.mrb[0].mxu0
      %v619 = vpop.f32.mrb[0].mxu0
      %v620 = vpop.f32.mrb[0].mxu0
      %621 = vdwg.mxu0
      %v622 = vadd.f32 %v573, %v617
      %623 = vst.msk [vmem:[#allocation2] sm:$0xff] %vm410, %v622
      %p624 = scmp.eq.s32.totalorder %s24, 3
      // Predicated region
      $region57: #{transformer_base_model.6} parent=51 // pred_check
        %p625 = pneg %p624
      $region58: #{transformer_base_model.6} parent=51 // pred_check_branch
        %627 = sbr.rel (%p625) target = $region60
      $region59: #{transformer_base_model.6} parent=51 // pred_region
        %v628 = vld [vmem:[#allocation2] sm:$0xff]
        %v629 = vld [vmem:[%s5] sm:$0x1]
        %v631 = vlaneseq
        %v632 = vshrl.u32 %v631, 7
        %v633 = vsub.s32 0, %v632
        %v634 = vrot.slane %v629, %v633
        %v636 = vadd.f32 %v628, %v634
        %v637 = vadd.f32 %v636, %v379
        %v638 = vld [vmem:[%s6] sm:$0x1]
        %v639 = vld [vmem:[%s7] sm:$0x1]
        %v640 = vsel %vm410, %v637, 0.0
        %641 = vadd.xlane.f32.xlu0 %v640
        %v642 = vpop.xlane.xlu0 %641
        %v643 = vrcp.pop 32.0
        %v644 = vmul.f32 %v642, %v643
        %v645 = vsub.f32 %v637, %v644
        %v646 = vmul.f32 %v645, %v645
        %v647 = vsel %vm410, %v646, 0.0
        %648 = vadd.xlane.f32.xlu0 %v647
        %v649 = vpop.xlane.xlu0 %648
        %v650 = vmul.f32 %v649, %v643
        %v651 = vadd.f32 %v650, 1e-12
        %v652 = vrsqrt.pop %v651
        %v653 = vmul.f32 %v645, %v652
        %v655 = vlaneseq
        %v656 = vshrl.u32 %v655, 7
        %v657 = vsub.s32 0, %v656
        %v658 = vrot.slane %v638, %v657
        %v660 = vmul.f32 %v653, %v658
        %v662 = vlaneseq
        %v663 = vshrl.u32 %v662, 7
        %v664 = vsub.s32 0, %v663
        %v665 = vrot.slane %v639, %v664
        %v667 = vadd.f32 %v660, %v665
        %668 = vst.msk [vmem:[%s377] sm:$0xff] %vm410, %v667
      $region60: #{transformer_base_model.6} parent=51 // pred_fallthru
        _
      %p669 = scmp.lt.s32.totalorder %s23, 1
      %s670 = scalar_select %p669, %s23, 1
      %s671 = smul.addr %s670, 8
      %s672 = scalar_lea.vmem %s8, %s671
      // Predicated region
      $region61: #{transformer_base_model.6} parent=51 // pred_check
        %p673 = pneg %p242
      $region62: #{transformer_base_model.6} parent=51 // pred_check_branch
        %675 = sbr.rel (%p673) target = $region64
      $region63: #{transformer_base_model.6} parent=51 // pred_region
        _
      $region64: #{transformer_base_model.6} parent=51 // pred_fallthru
        _
    $region52: #{transformer_base_model.6} parent=5 // pred_fallthru
      _
    %p676 = scmp.le.s32.totalorder 2, %s14
    // Predicated region
    $region65: #{transformer_base_model.6} parent=5 // pred_check
      %p677 = pneg %p676
    $region66: #{transformer_base_model.6} parent=5 // pred_check_branch
      %679 = sbr.rel (%p677) target = $region68
    $region67: #{transformer_base_model.6} parent=5 // pred_region
      %s680 = ssub.s32 %s14, 2
      // Predicated region
      $region69: #{transformer_base_model.6} parent=67 // pred_check
        %p681 = pneg %p248
      $region70: #{transformer_base_model.6} parent=67 // pred_check_branch
        %683 = sbr.rel (%p681) target = $region72
      $region71: #{transformer_base_model.6} parent=67 // pred_region
        %p684 = scmp.lt.s32.totalorder %s25, 1
        %s685 = scalar_select %p684, %s25, 1
        %s686 = smul.addr %s685, 8
        %s687 = scalar_lea.vmem %s8, %s686
      $region72: #{transformer_base_model.6} parent=67 // pred_fallthru
        _
    $region68: #{transformer_base_model.6} parent=5 // pred_fallthru
      _
  $region6: #{transformer_base_model.6} parent=0 // loop_footer
    %s18 = sadd.s32 1, %s14
  $region7: #{transformer_base_model.6} parent=0 // loop_footer_branch
    %13 = sbr.rel target = $region3
  $region8: #{transformer_base_model.6} parent=0 // loop_exit
    _

// kernel: transformer_base_model.7
$region0: #{transformer_base_model.7}
  #allocation0 [shape = 'u32[]', space=smem, size = 0x4, offset = 0x4, fixed_abs, tag = 'smem constant byte address 0x4 - core index']
  #allocation1 [shape = 'u32[144,128]{1,0:T(1,128)}', space=vmem, size = 0x12000, scoped, tag = 'internal scratch']
  #allocation2 [shape = 'f32[16,32]{1,0:T(8,128)}', space=vmem, size = 0x2000, scoped, tag = 'scratch operand']
  %s0 = inlined_call_operand.vmem [shape: f32[16,32], index: 0, kind: input, shape index: {}]
  %s1 = inlined_call_operand.vmem [shape: bf16[32,64], index: 1, kind: input, shape index: {}]
  %s2 = inlined_call_operand.vmem [shape: f32[1,64], index: 2, kind: input, shape index: {}]
  %s3 = inlined_call_operand.vmem [shape: bf16[64,32], index: 3, kind: input, shape index: {}]
  %s4 = inlined_call_operand.vmem [shape: f32[1,32], index: 4, kind: input, shape index: {}]
  %s5 = inlined_call_operand.vmem [shape: f32[1,32], index: 5, kind: input, shape index: {}]
  %s6 = inlined_call_operand.vmem [shape: f32[1,32], index: 6, kind: input, shape index: {}]
  %s7 = inlined_call_operand.vmem [shape: f32[16,32], index: 7, kind: output, shape index: {}]
  %s8 = sld [smem:[#allocation0]]
  $region38: #{transformer_base_model.7} parent=0
    _
  %s10 = ssub.s32 1, %s8
  %s11 = scalar_select 0, %s10, %s8
  // Predicated region
  $region2: #{transformer_base_model.7} parent=0 // pred_check
    _
  $region3: #{transformer_base_model.7} parent=0 // pred_check_branch
    %13 = sbr.rel (0) target = $region5
  $region4: #{transformer_base_model.7} parent=0 // pred_region
    _
  $region5: #{transformer_base_model.7} parent=0 // pred_fallthru
    _
  // Predicated region
  $region6: #{transformer_base_model.7} parent=0 // pred_check
    _
  $region7: #{transformer_base_model.7} parent=0 // pred_check_branch
    %15 = sbr.rel (0) target = $region9
  $region8: #{transformer_base_model.7} parent=0 // pred_region
    _
  $region9: #{transformer_base_model.7} parent=0 // pred_fallthru
    _
  // Predicated region
  $region10: #{transformer_base_model.7} parent=0 // pred_check
    _
  $region11: #{transformer_base_model.7} parent=0 // pred_check_branch
    %17 = sbr.rel (0) target = $region13
  $region12: #{transformer_base_model.7} parent=0 // pred_region
    _
  $region13: #{transformer_base_model.7} parent=0 // pred_fallthru
    _
  // Predicated region
  $region14: #{transformer_base_model.7} parent=0 // pred_check
    _
  $region15: #{transformer_base_model.7} parent=0 // pred_check_branch
    %19 = sbr.rel (0) target = $region17
  $region16: #{transformer_base_model.7} parent=0 // pred_region
    _
  $region17: #{transformer_base_model.7} parent=0 // pred_fallthru
    _
  // Predicated region
  $region18: #{transformer_base_model.7} parent=0 // pred_check
    _
  $region19: #{transformer_base_model.7} parent=0 // pred_check_branch
    %21 = sbr.rel (0) target = $region21
  $region20: #{transformer_base_model.7} parent=0 // pred_region
    _
  $region21: #{transformer_base_model.7} parent=0 // pred_fallthru
    _
  // Predicated region
  $region22: #{transformer_base_model.7} parent=0 // pred_check
    _
  $region23: #{transformer_base_model.7} parent=0 // pred_check_branch
    %23 = sbr.rel (0) target = $region25
  $region24: #{transformer_base_model.7} parent=0 // pred_region
    _
  $region25: #{transformer_base_model.7} parent=0 // pred_fallthru
    _
  // Predicated region
  $region26: #{transformer_base_model.7} parent=0 // pred_check
    _
  $region27: #{transformer_base_model.7} parent=0 // pred_check_branch
    %25 = sbr.rel (0) target = $region29
  $region28: #{transformer_base_model.7} parent=0 // pred_region
    _
  $region29: #{transformer_base_model.7} parent=0 // pred_fallthru
    _
  %v27 = vld [vmem:[%s0] sm:$0xff]
  %v28 = vld [vmem:[%s0 + $0x8] sm:$0xff]
  %v29 = vpack.c.bf16 %v28, %v27
  %v30 = vld [vmem:[%s1] sm:$0xf]
  %v31 = vld [vmem:[%s1 + $0x4] sm:$0xf]
  %v32 = vld [vmem:[%s1 + $0x8] sm:$0xf]
  %v33 = vld [vmem:[%s1 + $0xc] sm:$0xf]
  %v34 = vld [vmem:[%s2] sm:$0x1]
  %v36 = vlaneseq
  %v37 = vshrl.u32 %v36, 7
  %v38 = vsub.s32 0, %v37
  %v39 = vrot.slane %v34, %v38
  %v45 = vunpack.c.l.b16 %v30
  %v46 = vunpack.c.l.b16 %v31
  %v47 = vunpack.c.l.b16 %v32
  %v48 = vunpack.c.l.b16 %v33
  %v49 = vpack.c.b16 %v46, %v45
  %v50 = vpack.c.b16 %v48, %v47
  %vm53 = vcmask 261120
  %v55 = vsel %vm53, %v29, 0
  %57 = vmatprep.subr.bf16.mxu0 0
  %58 = vmatpush1.bf16.msra.mxu0 %v49
  %59 = vmatprep.subr.bf16.mxu0 0
  %60 = vmatpush1.bf16.msra.mxu0 %v50
  %61 = vmatprep.subr.bf16.mxu0 0
  %62 = vmatpush1.bf16.msra.mxu0 0
  %63 = vmatprep.subr.bf16.mxu0 0
  %64 = vmatpush1.bf16.msra.mxu0 0
  %65 = vmatprep.subr.bf16.mxu0 0
  %66 = vmatpush1.bf16.msra.mxu0 0
  %67 = vmatprep.subr.bf16.mxu0 0
  %68 = vmatpush1.bf16.msra.mxu0 0
  %69 = vmatprep.subr.bf16.mxu0 0
  %70 = vmatpush1.bf16.msra.mxu0 0
  %71 = vmatprep.subr.bf16.mxu0 0
  %72 = vmatpush1.bf16.msra.mxu0 0
  %73 = vmatprep.subr.bf16.mxu0 0
  %74 = vmatpush1.bf16.msra.mxu0 0
  %75 = vmatprep.subr.bf16.mxu0 0
  %76 = vmatpush1.bf16.msra.mxu0 0
  %77 = vmatprep.subr.bf16.mxu0 0
  %78 = vmatpush1.bf16.msra.mxu0 0
  %79 = vmatprep.subr.bf16.mxu0 0
  %80 = vmatpush1.bf16.msra.mxu0 0
  %81 = vmatprep.subr.bf16.mxu0 0
  %82 = vmatpush1.bf16.msra.mxu0 0
  %83 = vmatprep.subr.bf16.mxu0 0
  %84 = vmatpush1.bf16.msra.mxu0 0
  %85 = vmatprep.subr.bf16.mxu0 0
  %86 = vmatpush1.bf16.msra.mxu0 0
  %87 = vmatprep.subr.bf16.mxu0 0
  %88 = vmatpush1.bf16.msra.mxu0 0
  %89 = vmatprep.mubr.bf16.mxu0 0
  %90 = vmatmul.mubr.bf16.gmra.mrb[0].mxu0 %v55
  %v91 = vpop.f32.mrb[0].mxu0
  %v92 = vadd.f32 %v39, %v91
  %v93 = vpop.f32.mrb[0].mxu0
  %v94 = vpop.f32.mrb[0].mxu0
  %v95 = vadd.f32 %v39, %v94
  %v96 = vpop.f32.mrb[0].mxu0
  %97 = vdwg.mxu0
  %v98 = vmul.f32 %v92, 0.5
  %v99 = vmul.f32 %v95, 0.5
  %v100 = vmul.f32 %v92, 0.044715
  %v101 = vmul.f32 %v95, 0.044715
  %v102 = vmul.f32 %v100, %v92
  %v103 = vmul.f32 %v101, %v95
  %v104 = vmul.f32 %v102, %v92
  %v105 = vmul.f32 %v103, %v95
  %v106 = vadd.f32 %v92, %v104
  %v107 = vadd.f32 %v95, %v105
  %v108 = vmul.f32 %v106, 0.7978846
  %v109 = vmul.f32 %v107, 0.7978846
  %v110 = vtanh.pop %v108
  %v111 = vtanh.pop %v109
  %v112 = vadd.f32 %v110, 1.0
  %v113 = vadd.f32 %v111, 1.0
  %v114 = vmul.f32 %v98, %v112
  %v115 = vmul.f32 %v99, %v113
  %v116 = vpack.c.bf16 %v115, %v114
  %v117 = vld [vmem:[%s3] sm:$0xf]
  %v118 = vld [vmem:[%s3 + $0x4] sm:$0xf]
  %v119 = vld [vmem:[%s3 + $0x8] sm:$0xf]
  %v120 = vld [vmem:[%s3 + $0xc] sm:$0xf]
  %v121 = vld [vmem:[%s3 + $0x10] sm:$0xf]
  %v122 = vld [vmem:[%s3 + $0x14] sm:$0xf]
  %v123 = vld [vmem:[%s3 + $0x18] sm:$0xf]
  %v124 = vld [vmem:[%s3 + $0x1c] sm:$0xf]
  %v125 = vld [vmem:[%s4] sm:$0x1]
  %v127 = vlaneseq
  %v128 = vshrl.u32 %v127, 7
  %v129 = vsub.s32 0, %v128
  %v130 = vrot.slane %v125, %v129
  %v140 = vunpack.c.l.b16 %v117
  %v141 = vunpack.c.l.b16 %v118
  %v142 = vunpack.c.l.b16 %v119
  %v143 = vunpack.c.l.b16 %v120
  %v144 = vunpack.c.l.b16 %v121
  %v145 = vunpack.c.l.b16 %v122
  %v146 = vunpack.c.l.b16 %v123
  %v147 = vunpack.c.l.b16 %v124
  %v148 = vpack.c.b16 %v141, %v140
  %v149 = vpack.c.b16 %v143, %v142
  %v150 = vpack.c.b16 %v145, %v144
  %v151 = vpack.c.b16 %v147, %v146
  %vm156 = vcmask 523264
  %v158 = vsel %vm156, %v116, 0
  %160 = vmatprep.subr.bf16.mxu0 0
  %161 = vmatpush1.bf16.msra.mxu0 %v148
  %162 = vmatprep.subr.bf16.mxu0 0
  %163 = vmatpush1.bf16.msra.mxu0 %v149
  %164 = vmatprep.subr.bf16.mxu0 0
  %165 = vmatpush1.bf16.msra.mxu0 %v150
  %166 = vmatprep.subr.bf16.mxu0 0
  %167 = vmatpush1.bf16.msra.mxu0 %v151
  %168 = vmatprep.subr.bf16.mxu0 0
  %169 = vmatpush1.bf16.msra.mxu0 0
  %170 = vmatprep.subr.bf16.mxu0 0
  %171 = vmatpush1.bf16.msra.mxu0 0
  %172 = vmatprep.subr.bf16.mxu0 0
  %173 = vmatpush1.bf16.msra.mxu0 0
  %174 = vmatprep.subr.bf16.mxu0 0
  %175 = vmatpush1.bf16.msra.mxu0 0
  %176 = vmatprep.subr.bf16.mxu0 0
  %177 = vmatpush1.bf16.msra.mxu0 0
  %178 = vmatprep.subr.bf16.mxu0 0
  %179 = vmatpush1.bf16.msra.mxu0 0
  %180 = vmatprep.subr.bf16.mxu0 0
  %181 = vmatpush1.bf16.msra.mxu0 0
  %182 = vmatprep.subr.bf16.mxu0 0
  %183 = vmatpush1.bf16.msra.mxu0 0
  %184 = vmatprep.subr.bf16.mxu0 0
  %185 = vmatpush1.bf16.msra.mxu0 0
  %186 = vmatprep.subr.bf16.mxu0 0
  %187 = vmatpush1.bf16.msra.mxu0 0
  %188 = vmatprep.subr.bf16.mxu0 0
  %189 = vmatpush1.bf16.msra.mxu0 0
  %190 = vmatprep.subr.bf16.mxu0 0
  %191 = vmatpush1.bf16.msra.mxu0 0
  %192 = vmatprep.mubr.bf16.mxu0 0
  %193 = vmatmul.mubr.bf16.gmra.mrb[0].mxu0 %v158
  %v194 = vpop.f32.mrb[0].mxu0
  %v195 = vadd.f32 %v130, %v194
  %v196 = vpop.f32.mrb[0].mxu0
  %v197 = vpop.f32.mrb[0].mxu0
  %v198 = vadd.f32 %v130, %v197
  %v199 = vpop.f32.mrb[0].mxu0
  %200 = vdwg.mxu0
  %v201 = vadd.f32 %v195, %v27
  %v202 = vadd.f32 %v198, %v28
  %v203 = vld [vmem:[%s5] sm:$0x1]
  %v204 = vld [vmem:[%s6] sm:$0x1]
  %v205 = vsel %vm53, %v201, 0.0
  %206 = vadd.xlane.f32.xlu0 %v205
  %v207 = vpop.xlane.xlu0 %206
  %v208 = vsel %vm53, %v202, 0.0
  %209 = vadd.xlane.f32.xlu0 %v208
  %v210 = vpop.xlane.xlu0 %209
  %v211 = vrcp.pop 32.0
  %v212 = vmul.f32 %v207, %v211
  %v213 = vmul.f32 %v210, %v211
  %v214 = vsub.f32 %v201, %v212
  %v215 = vsub.f32 %v202, %v213
  %v216 = vmul.f32 %v214, %v214
  %v217 = vmul.f32 %v215, %v215
  %v218 = vsel %vm53, %v216, 0.0
  %219 = vadd.xlane.f32.xlu0 %v218
  %v220 = vpop.xlane.xlu0 %219
  %v221 = vsel %vm53, %v217, 0.0
  %222 = vadd.xlane.f32.xlu0 %v221
  %v223 = vpop.xlane.xlu0 %222
  %v224 = vmul.f32 %v220, %v211
  %v225 = vmul.f32 %v223, %v211
  %v226 = vadd.f32 %v224, 1e-12
  %v227 = vadd.f32 %v225, 1e-12
  %v228 = vrsqrt.pop %v226
  %v229 = vrsqrt.pop %v227
  %v230 = vmul.f32 %v214, %v228
  %v231 = vmul.f32 %v215, %v229
  %v233 = vlaneseq
  %v234 = vshrl.u32 %v233, 7
  %v235 = vsub.s32 0, %v234
  %v236 = vrot.slane %v203, %v235
  %v238 = vmul.f32 %v230, %v236
  %v239 = vmul.f32 %v231, %v236
  %v241 = vlaneseq
  %v242 = vshrl.u32 %v241, 7
  %v243 = vsub.s32 0, %v242
  %v244 = vrot.slane %v204, %v243
  %v246 = vadd.f32 %v238, %v244
  %v247 = vadd.f32 %v239, %v244
  %248 = vst.msk [vmem:[%s7] sm:$0xff] %vm53, %v246
  %249 = vst.msk [vmem:[%s7 + $0x8] sm:$0xff] %vm53, %v247
  // Predicated region
  $region30: #{transformer_base_model.7} parent=0 // pred_check
    _
  $region31: #{transformer_base_model.7} parent=0 // pred_check_branch
    %251 = sbr.rel (0) target = $region33
  $region32: #{transformer_base_model.7} parent=0 // pred_region
    _
  $region33: #{transformer_base_model.7} parent=0 // pred_fallthru
    _
  // Predicated region
  $region34: #{transformer_base_model.7} parent=0 // pred_check
    _
  $region35: #{transformer_base_model.7} parent=0 // pred_check_branch
    %253 = sbr.rel (0) target = $region37
  $region36: #{transformer_base_model.7} parent=0 // pred_region
    _
  $region37: #{transformer_base_model.7} parent=0 // pred_fallthru
    _

</llo_original>
